<compile_context>
chip_gen: v6e
topology: v6e:2x2x1
jax: 0.10.0
libtpu: 0.0.40
codegen_flags: <defaults>
</compile_context>

<pallas_src>
import functools

import jax
import jax.numpy as jnp
from jax import lax
from jax.experimental import pallas as pl
from jax.experimental.pallas import tpu as pltpu


def bilstm_head_kernel(x_ref, wih_ref, whh_f_ref, whh_b_ref, b_lstm_ref,
                       w_head_ref, b_head_ref, out_ref, gates_ref,
                       *, seq_len, batch):
    """Fused shared-BiLSTM (4 streams folded into rows) + BN/Linear/Sigmoid head.

    x_ref:      (T*4B, E)  bf16  time-major embedded tokens, row = t*4B + n*B + b
    wih_ref:    (E, 8H)    bf16  [W_ih_fwd | W_ih_bwd]^T, gate order i,f,g,o;
                                 sigmoid-gate columns pre-scaled by 0.5
    whh_f_ref:  (H, 4H)    bf16  hidden->gates, forward (transposed, pre-scaled)
    whh_b_ref:  (H, 4H)    bf16  hidden->gates, backward (transposed, pre-scaled)
    b_lstm_ref: (1, 8H)    f32   [b_ih+b_hh fwd | bwd], sigmoid gates pre-scaled
    w_head_ref: (8H, C)    f32   BN-folded fc_out weight (transposed)
    b_head_ref: (1, C)     f32   BN-folded fc_out bias
    out_ref:    (B, C)     f32   sigmoid(logits)
    gates_ref:  (T*4B, 8H) f32   scratch: precomputed input projections
    """
    T = seq_len
    B = batch
    R = 4 * B                       # 4 streams folded into the row (batch) dim
    H = whh_f_ref.shape[0]
    G = 4 * H                       # gates per direction

    # ---- 1) input projection for both directions: one big MXU matmul ----
    gin = jnp.dot(x_ref[...], wih_ref[...],
                  preferred_element_type=jnp.float32)            # (T*R, 8H) f32
    gates_ref[...] = gin + b_lstm_ref[...]                       # bias folded once

    # Hoisted gate-lane constants.  Sigmoid-gate (i, f, o) weights/biases were
    # pre-scaled by 0.5 in the wrapper, so every gate nonlinearity is ONE
    # full-width tanh:  sigmoid(z) = 0.5 * tanh(z / 2) + 0.5.
    lane = lax.broadcasted_iota(jnp.int32, (R, G), 1)
    is_g = (lane >= 2 * H) & (lane < 3 * H)
    post_mul = jnp.where(is_g, 1.0, 0.5).astype(jnp.float32)
    post_add = jnp.where(is_g, 0.0, 0.5).astype(jnp.float32)

    whh_f = whh_f_ref[...]
    whh_b = whh_b_ref[...]

    def lstm_step(g_pre, h, c, whh):
        gates = g_pre + jnp.dot(h.astype(jnp.bfloat16), whh,
                                preferred_element_type=jnp.float32)   # (R, 4H)
        act = jnp.tanh(gates) * post_mul + post_add       # one EUP pass (vreg-wide)
        i = act[:, 0 * H:1 * H]
        f = act[:, 1 * H:2 * H]
        g = act[:, 2 * H:3 * H]
        o = act[:, 3 * H:4 * H]
        c_new = f * c + i * g
        h_new = o * jnp.tanh(c_new)
        return h_new, c_new

    # ---- 2) fwd & bwd recurrences interleaved in one unrolled loop ----
    def body(t, carry):
        h_f, c_f, h_b, c_b = carry
        row_f = pl.multiple_of(t * R, R)
        row_b = pl.multiple_of((T - 1 - t) * R, R)
        # Load only the needed 128-lane gate half per direction (1 vreg each).
        g_f = gates_ref[pl.ds(row_f, R), pl.ds(0, G)]          # (R, 4H) fwd
        g_b = gates_ref[pl.ds(row_b, R), pl.ds(G, G)]          # (R, 4H) bwd
        h_f, c_f = lstm_step(g_f, h_f, c_f, whh_f)
        h_b, c_b = lstm_step(g_b, h_b, c_b, whh_b)
        return (h_f, c_f, h_b, c_b)

    z = jnp.zeros((R, H), jnp.float32)
    h_f, _, h_b, _ = lax.fori_loop(0, T, body, (z, z, z, z), unroll=True)
    # h_f == lstm_out[:, -1, :H]  (per stream);  h_b == lstm_out[:, 0, H:]

    # ---- 3) epilogue: per-stream concat + BN(folded) + Linear + Sigmoid ----
    # torch: X = cat([fwd_1|bwd_1|fwd_2|bwd_2|fwd_3|bwd_3|fwd_4|bwd_4], dim=1)
    # logits = X @ W' + b' decomposed per (stream, direction) H-block so the
    # (B, 8H) feature slab is never materialized / written to HBM.
    C = w_head_ref.shape[1]
    acc = jnp.zeros((B, C), jnp.float32)
    for n in range(4):
        acc = acc + jnp.dot(h_f[n * B:(n + 1) * B, :],
                            w_head_ref[(2 * n) * H:(2 * n + 1) * H, :],
                            preferred_element_type=jnp.float32)
        acc = acc + jnp.dot(h_b[n * B:(n + 1) * B, :],
                            w_head_ref[(2 * n + 1) * H:(2 * n + 2) * H, :],
                            preferred_element_type=jnp.float32)
    out_ref[...] = jax.nn.sigmoid(acc + b_head_ref[...])


# -------------------------------- Wrapper ------------------------------------
@jax.jit
def news_model_forward(ids_1, ids_2, ids_3, ids_4, params):
    emb = params["emb"]                  # (V, E) bf16
    B, T = ids_1.shape
    H = params["whh_f"].shape[0]
    C = params["w_fc"].shape[1]
    R = 4 * B

    # One gather straight into the time-major, stream-folded layout the kernel
    # consumes: row index = t*4B + n*B + b.  (bf16 halves the HBM traffic.)
    # TODO(synk): replace with an in-kernel scalar-prefetch DMA gather at scale.
    ids_all = jnp.stack([ids_1, ids_2, ids_3, ids_4], axis=0)      # (4, B, T)
    ids_tm = jnp.transpose(ids_all.reshape(R, T), (1, 0))          # (T, 4B)
    x2d = emb[ids_tm.reshape(-1)]                                  # (T*4B, E) bf16

    # Fold the sigmoid-gate 1/2 pre-scale (sigmoid(z) = 0.5*tanh(z/2)+0.5) into
    # the LSTM weights/biases once (tiny, off the recurrent critical path).
    # Gate order within each direction block: i, f, g, o.
    gate_scale = jnp.concatenate([jnp.full((2 * H,), 0.5, jnp.float32),
                                  jnp.ones((H,), jnp.float32),
                                  jnp.full((H,), 0.5, jnp.float32)])   # (4H,)
    scale8 = jnp.concatenate([gate_scale, gate_scale])                 # (8H,) fwd|bwd
    wih = (params["wih"].astype(jnp.float32) * scale8).astype(jnp.bfloat16)
    whh_f = (params["whh_f"].astype(jnp.float32) * gate_scale).astype(jnp.bfloat16)
    whh_b = (params["whh_b"].astype(jnp.float32) * gate_scale).astype(jnp.bfloat16)
    b_lstm = params["b_lstm"] * scale8[None, :]

    # Fold eval-mode BatchNorm1d into the fc_out weights:
    #   (x*scale + shift) @ W + b  ==  x @ (scale[:,None]*W) + (shift @ W + b)
    scale = params["bn_scale"]                                     # (1, 8H)
    shift = params["bn_shift"]                                     # (1, 8H)
    w_head = params["w_fc"] * jnp.transpose(scale)                 # (8H, C)
    b_head = shift @ params["w_fc"] + params["b_fc"]               # (1, C)

    kernel = functools.partial(bilstm_head_kernel, seq_len=T, batch=B)
    out = pl.pallas_call(
        kernel,
        out_shape=jax.ShapeDtypeStruct((B, C), jnp.float32),
        scratch_shapes=[pltpu.VMEM((T * R, 8 * H), jnp.float32)],
    )(x2d, wih, whh_f, whh_b, b_lstm, w_head, b_head)
    return out


# ------------------------- Pure-JAX reference (spec) --------------------------
def news_model_reference(ids_1, ids_2, ids_3, ids_4, params):
    """Direct (unscaled, un-fused) implementation of the PyTorch forward."""
    emb = params["emb"].astype(jnp.float32)
    H = params["whh_f"].shape[0]
    wih = params["wih"].astype(jnp.float32)            # (E, 8H) [fwd|bwd], i f g o
    whh_f = params["whh_f"].astype(jnp.float32)
    whh_b = params["whh_b"].astype(jnp.float32)
    b = params["b_lstm"]                                # (1, 8H)

    def run_dir(x, wih_dir, whh, b_dir, reverse):
        B = x.shape[0]

        def step(carry, xt):
            h, c = carry
            gates = xt @ wih_dir + h @ whh + b_dir
            i = jax.nn.sigmoid(gates[:, 0 * H:1 * H])
            f = jax.nn.sigmoid(gates[:, 1 * H:2 * H])
            g = jnp.tanh(gates[:, 2 * H:3 * H])
            o = jax.nn.sigmoid(gates[:, 3 * H:4 * H])
            c = f * c + i * g
            h = o * jnp.tanh(c)
            return (h, c), h

        xs = jnp.transpose(x, (1, 0, 2))                # (T, B, E)
        if reverse:
            xs = xs[::-1]
        (h, _), _ = lax.scan(step, (jnp.zeros((B, H)), jnp.zeros((B, H))), xs)
        return h

    feats = []
    for ids in (ids_1, ids_2, ids_3, ids_4):
        x = emb[ids]                                    # (B, T, E)
        hf = run_dir(x, wih[:, :4 * H], whh_f, b[:, :4 * H], reverse=False)
        hb = run_dir(x, wih[:, 4 * H:], whh_b, b[:, 4 * H:], reverse=True)
        feats.append(jnp.concatenate([hf, hb], axis=1))
    X = jnp.concatenate(feats, axis=1)                  # (B, 8H)
    X = X * params["bn_scale"] + params["bn_shift"]     # eval-mode BN
    logits = X @ params["w_fc"] + params["b_fc"]
    return jax.nn.sigmoid(logits)


# ------------------------------ Param setup ----------------------------------
def init_params(key, vocab_size, emb_dim, hidden_dim, num_classes):
    ks = jax.random.split(key, 12)
    H, E = hidden_dim, emb_dim
    s = 0.1

    def rnd(k, shape):
        return (s * jax.random.normal(k, shape)).astype(jnp.float32)

    # PyTorch LSTM weights (4H, E)/(4H, H), gate order (i, f, g, o), stored
    # transposed for x @ W; fwd|bwd input weights concatenated -> (E, 8H).
    wih_f = rnd(ks[1], (E, 4 * H))
    wih_b = rnd(ks[4], (E, 4 * H))
    b_f = rnd(ks[3], (1, 4 * H))          # b_ih + b_hh combined (fwd)
    b_b = rnd(ks[6], (1, 4 * H))          # b_ih + b_hh combined (bwd)

    params = {
        "emb":    rnd(ks[0], (vocab_size, E)).astype(jnp.bfloat16),
        "wih":    jnp.concatenate([wih_f, wih_b], axis=1),         # f32 (scaled later)
        "whh_f":  rnd(ks[2], (H, 4 * H)),
        "whh_b":  rnd(ks[5], (H, 4 * H)),
        "b_lstm": jnp.concatenate([b_f, b_b], axis=1),              # f32
    }

    feat = 2 * H * 4
    gamma = 1.0 + rnd(ks[7], (1, feat))
    beta = rnd(ks[8], (1, feat))
    running_mean = jnp.zeros((1, feat), jnp.float32)
    running_var = jnp.ones((1, feat), jnp.float32)
    eps = 1e-5
    scale = gamma / jnp.sqrt(running_var + eps)
    params["bn_scale"] = scale
    params["bn_shift"] = beta - running_mean * scale
    params["w_fc"] = rnd(ks[9], (feat, num_classes))
    params["b_fc"] = rnd(ks[10], (1, num_classes))
    return params


if __name__ == "__main__":
    # Small, module-consistent shapes.
    B, T = 2, 8              # batch, seq_len
    VOCAB = 64
    EMB = 300                # fixed by nn.LSTM(input_size=300)
    H = 32                   # hidden_dim
    C = 1                    # num_classes (binary, sigmoid output)

    key = jax.random.PRNGKey(0)
    kp, k1, k2, k3, k4 = jax.random.split(key, 5)
    params = init_params(kp, VOCAB, EMB, H, C)

    ids_1 = jax.random.randint(k1, (B, T), 0, VOCAB, dtype=jnp.int32)
    ids_2 = jax.random.randint(k2, (B, T), 0, VOCAB, dtype=jnp.int32)
    ids_3 = jax.random.randint(k3, (B, T), 0, VOCAB, dtype=jnp.int32)
    ids_4 = jax.random.randint(k4, (B, T), 0, VOCAB, dtype=jnp.int32)

    out = news_model_forward(ids_1, ids_2, ids_3, ids_4, params)
    out = jax.block_until_ready(out)
    assert out.shape == (B, C), out.shape
    assert bool(jnp.all(jnp.isfinite(out)))

    # Correctness vs. a pure-JAX reference of the PyTorch forward (bf16 matmuls
    # in the kernel -> loose tolerance).
    ref = news_model_reference(ids_1, ids_2, ids_3, ids_4, params)
    assert jnp.allclose(out, ref, atol=1e-2, rtol=1e-2), (out, ref)

    print("KERNEL_OK")
</pallas_src>

<mosaic_0001>
module attributes {stable_mosaic.version = 11 : i64} {
  func.func @bilstm_head_kernel(%arg0: memref<64x300xbf16, #tpu.memory_space<vmem>>, %arg1: memref<300x256xbf16, #tpu.memory_space<vmem>>, %arg2: memref<32x128xbf16, #tpu.memory_space<vmem>>, %arg3: memref<32x128xbf16, #tpu.memory_space<vmem>>, %arg4: memref<1x256xf32, #tpu.memory_space<vmem>>, %arg5: memref<256x1xf32, #tpu.memory_space<vmem>>, %arg6: memref<1x1xf32, #tpu.memory_space<vmem>>, %arg7: memref<2x1xf32, #tpu.memory_space<vmem>>, %arg8: memref<64x256xf32, #tpu.memory_space<vmem>>) attributes {dimension_semantics = [], scalar_prefetch = 0 : i64, scratch_operands = 1 : i64, tpu.core_type = #tpu.core_type<tc>} {
    %c0 = arith.constant 0 : index
    %c0_0 = arith.constant 0 : index
    %0 = vector.load %arg0[%c0, %c0_0] : memref<64x300xbf16, #tpu.memory_space<vmem>>, vector<64x300xbf16>
    %c0_1 = arith.constant 0 : index
    %c0_2 = arith.constant 0 : index
    %1 = vector.load %arg1[%c0_1, %c0_2] : memref<300x256xbf16, #tpu.memory_space<vmem>>, vector<300x256xbf16>
    %cst = arith.constant dense<0.000000e+00> : vector<64x256xf32>
    %2 = tpu.matmul %0, %1, %cst {dimension_numbers = #tpu.dot_dimension_numbers<[1], [0], [0], [1], [0, 0, 1, 1], [], []>} : vector<64x300xbf16>, vector<300x256xbf16>, vector<64x256xf32> -> vector<64x256xf32>
    %c0_3 = arith.constant 0 : index
    %c0_4 = arith.constant 0 : index
    %3 = vector.load %arg4[%c0_3, %c0_4] : memref<1x256xf32, #tpu.memory_space<vmem>>, vector<1x256xf32>
    %4 = vector.broadcast %3 : vector<1x256xf32> to vector<64x256xf32>
    %5 = arith.addf %2, %4 : vector<64x256xf32>
    %c0_5 = arith.constant 0 : index
    %c0_6 = arith.constant 0 : index
    %6 = vector.load %arg8[%c0_5, %c0_6] : memref<64x256xf32, #tpu.memory_space<vmem>>, vector<64x256xf32>
    tpu.vector_store %arg8[%c0_5, %c0_6], %5 {strides = array<i32>} : memref<64x256xf32, #tpu.memory_space<vmem>>, vector<64x256xf32>,
    %7 = tpu.iota {dimensions = array<i32: 1>} : vector<8x128xi32>
    %c64_i32 = arith.constant 64 : i32
    %8 = vector.broadcast %c64_i32 : i32 to vector<8x128xi32>
    %9 = arith.cmpi sge, %7, %8 : vector<8x128xi32>
    %c96_i32 = arith.constant 96 : i32
    %10 = vector.broadcast %c96_i32 : i32 to vector<8x128xi32>
    %11 = arith.cmpi slt, %7, %10 : vector<8x128xi32>
    %12 = arith.andi %9, %11 : vector<8x128xi1>
    %cst_7 = arith.constant 1.000000e+00 : f32
    %cst_8 = arith.constant 5.000000e-01 : f32
    %13 = vector.broadcast %cst_7 : f32 to vector<8x128xf32>
    %14 = vector.broadcast %cst_8 : f32 to vector<8x128xf32>
    %15 = arith.select %12, %13, %14 : vector<8x128xi1>, vector<8x128xf32>
    %cst_9 = arith.constant 0.000000e+00 : f32
    %cst_10 = arith.constant 5.000000e-01 : f32
    %16 = vector.broadcast %cst_9 : f32 to vector<8x128xf32>
    %17 = vector.broadcast %cst_10 : f32 to vector<8x128xf32>
    %18 = arith.select %12, %16, %17 : vector<8x128xi1>, vector<8x128xf32>
    %c0_11 = arith.constant 0 : index
    %c0_12 = arith.constant 0 : index
    %19 = vector.load %arg2[%c0_11, %c0_12] : memref<32x128xbf16, #tpu.memory_space<vmem>>, vector<32x128xbf16>
    %c0_13 = arith.constant 0 : index
    %c0_14 = arith.constant 0 : index
    %20 = vector.load %arg3[%c0_13, %c0_14] : memref<32x128xbf16, #tpu.memory_space<vmem>>, vector<32x128xbf16>
    %cst_15 = arith.constant 0.000000e+00 : f32
    %21 = vector.broadcast %cst_15 : f32 to vector<8x32xf32>
    %c0_i32 = arith.constant 0 : i32
    %c8_i32 = arith.constant 8 : i32
    %22 = arith.muli %c0_i32, %c8_i32 : i32
    %23 = tpu.assume_multiple %22, 8 : i32
    %c7_i32 = arith.constant 7 : i32
    %24 = arith.subi %c7_i32, %c0_i32 : i32
    %c8_i32_16 = arith.constant 8 : i32
    %25 = arith.muli %24, %c8_i32_16 : i32
    %26 = tpu.assume_multiple %25, 8 : i32
    %27 = arith.index_cast %23 : i32 to index
    %c0_17 = arith.constant 0 : index
    %28 = vector.load %arg8[%27, %c0_17] : memref<64x256xf32, #tpu.memory_space<vmem>>, vector<8x128xf32>
    %29 = arith.index_cast %26 : i32 to index
    %c128 = arith.constant 128 : index
    %30 = vector.load %arg8[%29, %c128] : memref<64x256xf32, #tpu.memory_space<vmem>>, vector<8x128xf32>
    %31 = arith.truncf %21 : vector<8x32xf32> to vector<8x32xbf16>
    %cst_18 = arith.constant dense<0.000000e+00> : vector<8x128xf32>
    %32 = tpu.matmul %31, %19, %cst_18 {dimension_numbers = #tpu.dot_dimension_numbers<[1], [0], [0], [1], [0, 0, 1, 1], [], []>} : vector<8x32xbf16>, vector<32x128xbf16>, vector<8x128xf32> -> vector<8x128xf32>
    %33 = arith.addf %28, %32 : vector<8x128xf32>
    %34 = math.tanh %33 : vector<8x128xf32>
    %35 = arith.mulf %34, %15 : vector<8x128xf32>
    %36 = arith.addf %35, %18 : vector<8x128xf32>
    %37 = vector.extract_strided_slice %36 {offsets = [0, 0], sizes = [8, 32], strides = [1, 1]} : vector<8x128xf32> to vector<8x32xf32>
    %38 = vector.extract_strided_slice %36 {offsets = [0, 32], sizes = [8, 32], strides = [1, 1]} : vector<8x128xf32> to vector<8x32xf32>
    %39 = vector.extract_strided_slice %36 {offsets = [0, 64], sizes = [8, 32], strides = [1, 1]} : vector<8x128xf32> to vector<8x32xf32>
    %40 = vector.extract_strided_slice %36 {offsets = [0, 96], sizes = [8, 32], strides = [1, 1]} : vector<8x128xf32> to vector<8x32xf32>
    %41 = arith.mulf %38, %21 : vector<8x32xf32>
    %42 = arith.mulf %37, %39 : vector<8x32xf32>
    %43 = arith.addf %41, %42 : vector<8x32xf32>
    %44 = math.tanh %43 : vector<8x32xf32>
    %45 = arith.mulf %40, %44 : vector<8x32xf32>
    %46 = arith.truncf %21 : vector<8x32xf32> to vector<8x32xbf16>
    %cst_19 = arith.constant dense<0.000000e+00> : vector<8x128xf32>
    %47 = tpu.matmul %46, %20, %cst_19 {dimension_numbers = #tpu.dot_dimension_numbers<[1], [0], [0], [1], [0, 0, 1, 1], [], []>} : vector<8x32xbf16>, vector<32x128xbf16>, vector<8x128xf32> -> vector<8x128xf32>
    %48 = arith.addf %30, %47 : vector<8x128xf32>
    %49 = math.tanh %48 : vector<8x128xf32>
    %50 = arith.mulf %49, %15 : vector<8x128xf32>
    %51 = arith.addf %50, %18 : vector<8x128xf32>
    %52 = vector.extract_strided_slice %51 {offsets = [0, 0], sizes = [8, 32], strides = [1, 1]} : vector<8x128xf32> to vector<8x32xf32>
    %53 = vector.extract_strided_slice %51 {offsets = [0, 32], sizes = [8, 32], strides = [1, 1]} : vector<8x128xf32> to vector<8x32xf32>
    %54 = vector.extract_strided_slice %51 {offsets = [0, 64], sizes = [8, 32], strides = [1, 1]} : vector<8x128xf32> to vector<8x32xf32>
    %55 = vector.extract_strided_slice %51 {offsets = [0, 96], sizes = [8, 32], strides = [1, 1]} : vector<8x128xf32> to vector<8x32xf32>
    %56 = arith.mulf %53, %21 : vector<8x32xf32>
    %57 = arith.mulf %52, %54 : vector<8x32xf32>
    %58 = arith.addf %56, %57 : vector<8x32xf32>
    %59 = math.tanh %58 : vector<8x32xf32>
    %60 = arith.mulf %55, %59 : vector<8x32xf32>
    %c1_i32 = arith.constant 1 : i32
    %c8_i32_20 = arith.constant 8 : i32
    %61 = arith.muli %c1_i32, %c8_i32_20 : i32
    %62 = tpu.assume_multiple %61, 8 : i32
    %c7_i32_21 = arith.constant 7 : i32
    %63 = arith.subi %c7_i32_21, %c1_i32 : i32
    %c8_i32_22 = arith.constant 8 : i32
    %64 = arith.muli %63, %c8_i32_22 : i32
    %65 = tpu.assume_multiple %64, 8 : i32
    %66 = arith.index_cast %62 : i32 to index
    %c0_23 = arith.constant 0 : index
    %67 = vector.load %arg8[%66, %c0_23] : memref<64x256xf32, #tpu.memory_space<vmem>>, vector<8x128xf32>
    %68 = arith.index_cast %65 : i32 to index
    %c128_24 = arith.constant 128 : index
    %69 = vector.load %arg8[%68, %c128_24] : memref<64x256xf32, #tpu.memory_space<vmem>>, vector<8x128xf32>
    %70 = arith.truncf %45 : vector<8x32xf32> to vector<8x32xbf16>
    %cst_25 = arith.constant dense<0.000000e+00> : vector<8x128xf32>
    %71 = tpu.matmul %70, %19, %cst_25 {dimension_numbers = #tpu.dot_dimension_numbers<[1], [0], [0], [1], [0, 0, 1, 1], [], []>} : vector<8x32xbf16>, vector<32x128xbf16>, vector<8x128xf32> -> vector<8x128xf32>
    %72 = arith.addf %67, %71 : vector<8x128xf32>
    %73 = math.tanh %72 : vector<8x128xf32>
    %74 = arith.mulf %73, %15 : vector<8x128xf32>
    %75 = arith.addf %74, %18 : vector<8x128xf32>
    %76 = vector.extract_strided_slice %75 {offsets = [0, 0], sizes = [8, 32], strides = [1, 1]} : vector<8x128xf32> to vector<8x32xf32>
    %77 = vector.extract_strided_slice %75 {offsets = [0, 32], sizes = [8, 32], strides = [1, 1]} : vector<8x128xf32> to vector<8x32xf32>
    %78 = vector.extract_strided_slice %75 {offsets = [0, 64], sizes = [8, 32], strides = [1, 1]} : vector<8x128xf32> to vector<8x32xf32>
    %79 = vector.extract_strided_slice %75 {offsets = [0, 96], sizes = [8, 32], strides = [1, 1]} : vector<8x128xf32> to vector<8x32xf32>
    %80 = arith.mulf %77, %43 : vector<8x32xf32>
    %81 = arith.mulf %76, %78 : vector<8x32xf32>
    %82 = arith.addf %80, %81 : vector<8x32xf32>
    %83 = math.tanh %82 : vector<8x32xf32>
    %84 = arith.mulf %79, %83 : vector<8x32xf32>
    %85 = arith.truncf %60 : vector<8x32xf32> to vector<8x32xbf16>
    %cst_26 = arith.constant dense<0.000000e+00> : vector<8x128xf32>
    %86 = tpu.matmul %85, %20, %cst_26 {dimension_numbers = #tpu.dot_dimension_numbers<[1], [0], [0], [1], [0, 0, 1, 1], [], []>} : vector<8x32xbf16>, vector<32x128xbf16>, vector<8x128xf32> -> vector<8x128xf32>
    %87 = arith.addf %69, %86 : vector<8x128xf32>
    %88 = math.tanh %87 : vector<8x128xf32>
    %89 = arith.mulf %88, %15 : vector<8x128xf32>
    %90 = arith.addf %89, %18 : vector<8x128xf32>
    %91 = vector.extract_strided_slice %90 {offsets = [0, 0], sizes = [8, 32], strides = [1, 1]} : vector<8x128xf32> to vector<8x32xf32>
    %92 = vector.extract_strided_slice %90 {offsets = [0, 32], sizes = [8, 32], strides = [1, 1]} : vector<8x128xf32> to vector<8x32xf32>
    %93 = vector.extract_strided_slice %90 {offsets = [0, 64], sizes = [8, 32], strides = [1, 1]} : vector<8x128xf32> to vector<8x32xf32>
    %94 = vector.extract_strided_slice %90 {offsets = [0, 96], sizes = [8, 32], strides = [1, 1]} : vector<8x128xf32> to vector<8x32xf32>
    %95 = arith.mulf %92, %58 : vector<8x32xf32>
    %96 = arith.mulf %91, %93 : vector<8x32xf32>
    %97 = arith.addf %95, %96 : vector<8x32xf32>
    %98 = math.tanh %97 : vector<8x32xf32>
    %99 = arith.mulf %94, %98 : vector<8x32xf32>
    %c2_i32 = arith.constant 2 : i32
    %c8_i32_27 = arith.constant 8 : i32
    %100 = arith.muli %c2_i32, %c8_i32_27 : i32
    %101 = tpu.assume_multiple %100, 8 : i32
    %c7_i32_28 = arith.constant 7 : i32
    %102 = arith.subi %c7_i32_28, %c2_i32 : i32
    %c8_i32_29 = arith.constant 8 : i32
    %103 = arith.muli %102, %c8_i32_29 : i32
    %104 = tpu.assume_multiple %103, 8 : i32
    %105 = arith.index_cast %101 : i32 to index
    %c0_30 = arith.constant 0 : index
    %106 = vector.load %arg8[%105, %c0_30] : memref<64x256xf32, #tpu.memory_space<vmem>>, vector<8x128xf32>
    %107 = arith.index_cast %104 : i32 to index
    %c128_31 = arith.constant 128 : index
    %108 = vector.load %arg8[%107, %c128_31] : memref<64x256xf32, #tpu.memory_space<vmem>>, vector<8x128xf32>
    %109 = arith.truncf %84 : vector<8x32xf32> to vector<8x32xbf16>
    %cst_32 = arith.constant dense<0.000000e+00> : vector<8x128xf32>
    %110 = tpu.matmul %109, %19, %cst_32 {dimension_numbers = #tpu.dot_dimension_numbers<[1], [0], [0], [1], [0, 0, 1, 1], [], []>} : vector<8x32xbf16>, vector<32x128xbf16>, vector<8x128xf32> -> vector<8x128xf32>
    %111 = arith.addf %106, %110 : vector<8x128xf32>
    %112 = math.tanh %111 : vector<8x128xf32>
    %113 = arith.mulf %112, %15 : vector<8x128xf32>
    %114 = arith.addf %113, %18 : vector<8x128xf32>
    %115 = vector.extract_strided_slice %114 {offsets = [0, 0], sizes = [8, 32], strides = [1, 1]} : vector<8x128xf32> to vector<8x32xf32>
    %116 = vector.extract_strided_slice %114 {offsets = [0, 32], sizes = [8, 32], strides = [1, 1]} : vector<8x128xf32> to vector<8x32xf32>
    %117 = vector.extract_strided_slice %114 {offsets = [0, 64], sizes = [8, 32], strides = [1, 1]} : vector<8x128xf32> to vector<8x32xf32>
    %118 = vector.extract_strided_slice %114 {offsets = [0, 96], sizes = [8, 32], strides = [1, 1]} : vector<8x128xf32> to vector<8x32xf32>
    %119 = arith.mulf %116, %82 : vector<8x32xf32>
    %120 = arith.mulf %115, %117 : vector<8x32xf32>
    %121 = arith.addf %119, %120 : vector<8x32xf32>
    %122 = math.tanh %121 : vector<8x32xf32>
    %123 = arith.mulf %118, %122 : vector<8x32xf32>
    %124 = arith.truncf %99 : vector<8x32xf32> to vector<8x32xbf16>
    %cst_33 = arith.constant dense<0.000000e+00> : vector<8x128xf32>
    %125 = tpu.matmul %124, %20, %cst_33 {dimension_numbers = #tpu.dot_dimension_numbers<[1], [0], [0], [1], [0, 0, 1, 1], [], []>} : vector<8x32xbf16>, vector<32x128xbf16>, vector<8x128xf32> -> vector<8x128xf32>
    %126 = arith.addf %108, %125 : vector<8x128xf32>
    %127 = math.tanh %126 : vector<8x128xf32>
    %128 = arith.mulf %127, %15 : vector<8x128xf32>
    %129 = arith.addf %128, %18 : vector<8x128xf32>
    %130 = vector.extract_strided_slice %129 {offsets = [0, 0], sizes = [8, 32], strides = [1, 1]} : vector<8x128xf32> to vector<8x32xf32>
    %131 = vector.extract_strided_slice %129 {offsets = [0, 32], sizes = [8, 32], strides = [1, 1]} : vector<8x128xf32> to vector<8x32xf32>
    %132 = vector.extract_strided_slice %129 {offsets = [0, 64], sizes = [8, 32], strides = [1, 1]} : vector<8x128xf32> to vector<8x32xf32>
    %133 = vector.extract_strided_slice %129 {offsets = [0, 96], sizes = [8, 32], strides = [1, 1]} : vector<8x128xf32> to vector<8x32xf32>
    %134 = arith.mulf %131, %97 : vector<8x32xf32>
    %135 = arith.mulf %130, %132 : vector<8x32xf32>
    %136 = arith.addf %134, %135 : vector<8x32xf32>
    %137 = math.tanh %136 : vector<8x32xf32>
    %138 = arith.mulf %133, %137 : vector<8x32xf32>
    %c3_i32 = arith.constant 3 : i32
    %c8_i32_34 = arith.constant 8 : i32
    %139 = arith.muli %c3_i32, %c8_i32_34 : i32
    %140 = tpu.assume_multiple %139, 8 : i32
    %c7_i32_35 = arith.constant 7 : i32
    %141 = arith.subi %c7_i32_35, %c3_i32 : i32
    %c8_i32_36 = arith.constant 8 : i32
    %142 = arith.muli %141, %c8_i32_36 : i32
    %143 = tpu.assume_multiple %142, 8 : i32
    %144 = arith.index_cast %140 : i32 to index
    %c0_37 = arith.constant 0 : index
    %145 = vector.load %arg8[%144, %c0_37] : memref<64x256xf32, #tpu.memory_space<vmem>>, vector<8x128xf32>
    %146 = arith.index_cast %143 : i32 to index
    %c128_38 = arith.constant 128 : index
    %147 = vector.load %arg8[%146, %c128_38] : memref<64x256xf32, #tpu.memory_space<vmem>>, vector<8x128xf32>
    %148 = arith.truncf %123 : vector<8x32xf32> to vector<8x32xbf16>
    %cst_39 = arith.constant dense<0.000000e+00> : vector<8x128xf32>
    %149 = tpu.matmul %148, %19, %cst_39 {dimension_numbers = #tpu.dot_dimension_numbers<[1], [0], [0], [1], [0, 0, 1, 1], [], []>} : vector<8x32xbf16>, vector<32x128xbf16>, vector<8x128xf32> -> vector<8x128xf32>
    %150 = arith.addf %145, %149 : vector<8x128xf32>
    %151 = math.tanh %150 : vector<8x128xf32>
    %152 = arith.mulf %151, %15 : vector<8x128xf32>
    %153 = arith.addf %152, %18 : vector<8x128xf32>
    %154 = vector.extract_strided_slice %153 {offsets = [0, 0], sizes = [8, 32], strides = [1, 1]} : vector<8x128xf32> to vector<8x32xf32>
    %155 = vector.extract_strided_slice %153 {offsets = [0, 32], sizes = [8, 32], strides = [1, 1]} : vector<8x128xf32> to vector<8x32xf32>
    %156 = vector.extract_strided_slice %153 {offsets = [0, 64], sizes = [8, 32], strides = [1, 1]} : vector<8x128xf32> to vector<8x32xf32>
    %157 = vector.extract_strided_slice %153 {offsets = [0, 96], sizes = [8, 32], strides = [1, 1]} : vector<8x128xf32> to vector<8x32xf32>
    %158 = arith.mulf %155, %121 : vector<8x32xf32>
    %159 = arith.mulf %154, %156 : vector<8x32xf32>
    %160 = arith.addf %158, %159 : vector<8x32xf32>
    %161 = math.tanh %160 : vector<8x32xf32>
    %162 = arith.mulf %157, %161 : vector<8x32xf32>
    %163 = arith.truncf %138 : vector<8x32xf32> to vector<8x32xbf16>
    %cst_40 = arith.constant dense<0.000000e+00> : vector<8x128xf32>
    %164 = tpu.matmul %163, %20, %cst_40 {dimension_numbers = #tpu.dot_dimension_numbers<[1], [0], [0], [1], [0, 0, 1, 1], [], []>} : vector<8x32xbf16>, vector<32x128xbf16>, vector<8x128xf32> -> vector<8x128xf32>
    %165 = arith.addf %147, %164 : vector<8x128xf32>
    %166 = math.tanh %165 : vector<8x128xf32>
    %167 = arith.mulf %166, %15 : vector<8x128xf32>
    %168 = arith.addf %167, %18 : vector<8x128xf32>
    %169 = vector.extract_strided_slice %168 {offsets = [0, 0], sizes = [8, 32], strides = [1, 1]} : vector<8x128xf32> to vector<8x32xf32>
    %170 = vector.extract_strided_slice %168 {offsets = [0, 32], sizes = [8, 32], strides = [1, 1]} : vector<8x128xf32> to vector<8x32xf32>
    %171 = vector.extract_strided_slice %168 {offsets = [0, 64], sizes = [8, 32], strides = [1, 1]} : vector<8x128xf32> to vector<8x32xf32>
    %172 = vector.extract_strided_slice %168 {offsets = [0, 96], sizes = [8, 32], strides = [1, 1]} : vector<8x128xf32> to vector<8x32xf32>
    %173 = arith.mulf %170, %136 : vector<8x32xf32>
    %174 = arith.mulf %169, %171 : vector<8x32xf32>
    %175 = arith.addf %173, %174 : vector<8x32xf32>
    %176 = math.tanh %175 : vector<8x32xf32>
    %177 = arith.mulf %172, %176 : vector<8x32xf32>
    %c4_i32 = arith.constant 4 : i32
    %c8_i32_41 = arith.constant 8 : i32
    %178 = arith.muli %c4_i32, %c8_i32_41 : i32
    %179 = tpu.assume_multiple %178, 8 : i32
    %c7_i32_42 = arith.constant 7 : i32
    %180 = arith.subi %c7_i32_42, %c4_i32 : i32
    %c8_i32_43 = arith.constant 8 : i32
    %181 = arith.muli %180, %c8_i32_43 : i32
    %182 = tpu.assume_multiple %181, 8 : i32
    %183 = arith.index_cast %179 : i32 to index
    %c0_44 = arith.constant 0 : index
    %184 = vector.load %arg8[%183, %c0_44] : memref<64x256xf32, #tpu.memory_space<vmem>>, vector<8x128xf32>
    %185 = arith.index_cast %182 : i32 to index
    %c128_45 = arith.constant 128 : index
    %186 = vector.load %arg8[%185, %c128_45] : memref<64x256xf32, #tpu.memory_space<vmem>>, vector<8x128xf32>
    %187 = arith.truncf %162 : vector<8x32xf32> to vector<8x32xbf16>
    %cst_46 = arith.constant dense<0.000000e+00> : vector<8x128xf32>
    %188 = tpu.matmul %187, %19, %cst_46 {dimension_numbers = #tpu.dot_dimension_numbers<[1], [0], [0], [1], [0, 0, 1, 1], [], []>} : vector<8x32xbf16>, vector<32x128xbf16>, vector<8x128xf32> -> vector<8x128xf32>
    %189 = arith.addf %184, %188 : vector<8x128xf32>
    %190 = math.tanh %189 : vector<8x128xf32>
    %191 = arith.mulf %190, %15 : vector<8x128xf32>
    %192 = arith.addf %191, %18 : vector<8x128xf32>
    %193 = vector.extract_strided_slice %192 {offsets = [0, 0], sizes = [8, 32], strides = [1, 1]} : vector<8x128xf32> to vector<8x32xf32>
    %194 = vector.extract_strided_slice %192 {offsets = [0, 32], sizes = [8, 32], strides = [1, 1]} : vector<8x128xf32> to vector<8x32xf32>
    %195 = vector.extract_strided_slice %192 {offsets = [0, 64], sizes = [8, 32], strides = [1, 1]} : vector<8x128xf32> to vector<8x32xf32>
    %196 = vector.extract_strided_slice %192 {offsets = [0, 96], sizes = [8, 32], strides = [1, 1]} : vector<8x128xf32> to vector<8x32xf32>
    %197 = arith.mulf %194, %160 : vector<8x32xf32>
    %198 = arith.mulf %193, %195 : vector<8x32xf32>
    %199 = arith.addf %197, %198 : vector<8x32xf32>
    %200 = math.tanh %199 : vector<8x32xf32>
    %201 = arith.mulf %196, %200 : vector<8x32xf32>
    %202 = arith.truncf %177 : vector<8x32xf32> to vector<8x32xbf16>
    %cst_47 = arith.constant dense<0.000000e+00> : vector<8x128xf32>
    %203 = tpu.matmul %202, %20, %cst_47 {dimension_numbers = #tpu.dot_dimension_numbers<[1], [0], [0], [1], [0, 0, 1, 1], [], []>} : vector<8x32xbf16>, vector<32x128xbf16>, vector<8x128xf32> -> vector<8x128xf32>
    %204 = arith.addf %186, %203 : vector<8x128xf32>
    %205 = math.tanh %204 : vector<8x128xf32>
    %206 = arith.mulf %205, %15 : vector<8x128xf32>
    %207 = arith.addf %206, %18 : vector<8x128xf32>
    %208 = vector.extract_strided_slice %207 {offsets = [0, 0], sizes = [8, 32], strides = [1, 1]} : vector<8x128xf32> to vector<8x32xf32>
    %209 = vector.extract_strided_slice %207 {offsets = [0, 32], sizes = [8, 32], strides = [1, 1]} : vector<8x128xf32> to vector<8x32xf32>
    %210 = vector.extract_strided_slice %207 {offsets = [0, 64], sizes = [8, 32], strides = [1, 1]} : vector<8x128xf32> to vector<8x32xf32>
    %211 = vector.extract_strided_slice %207 {offsets = [0, 96], sizes = [8, 32], strides = [1, 1]} : vector<8x128xf32> to vector<8x32xf32>
    %212 = arith.mulf %209, %175 : vector<8x32xf32>
    %213 = arith.mulf %208, %210 : vector<8x32xf32>
    %214 = arith.addf %212, %213 : vector<8x32xf32>
    %215 = math.tanh %214 : vector<8x32xf32>
    %216 = arith.mulf %211, %215 : vector<8x32xf32>
    %c5_i32 = arith.constant 5 : i32
    %c8_i32_48 = arith.constant 8 : i32
    %217 = arith.muli %c5_i32, %c8_i32_48 : i32
    %218 = tpu.assume_multiple %217, 8 : i32
    %c7_i32_49 = arith.constant 7 : i32
    %219 = arith.subi %c7_i32_49, %c5_i32 : i32
    %c8_i32_50 = arith.constant 8 : i32
    %220 = arith.muli %219, %c8_i32_50 : i32
    %221 = tpu.assume_multiple %220, 8 : i32
    %222 = arith.index_cast %218 : i32 to index
    %c0_51 = arith.constant 0 : index
    %223 = vector.load %arg8[%222, %c0_51] : memref<64x256xf32, #tpu.memory_space<vmem>>, vector<8x128xf32>
    %224 = arith.index_cast %221 : i32 to index
    %c128_52 = arith.constant 128 : index
    %225 = vector.load %arg8[%224, %c128_52] : memref<64x256xf32, #tpu.memory_space<vmem>>, vector<8x128xf32>
    %226 = arith.truncf %201 : vector<8x32xf32> to vector<8x32xbf16>
    %cst_53 = arith.constant dense<0.000000e+00> : vector<8x128xf32>
    %227 = tpu.matmul %226, %19, %cst_53 {dimension_numbers = #tpu.dot_dimension_numbers<[1], [0], [0], [1], [0, 0, 1, 1], [], []>} : vector<8x32xbf16>, vector<32x128xbf16>, vector<8x128xf32> -> vector<8x128xf32>
    %228 = arith.addf %223, %227 : vector<8x128xf32>
    %229 = math.tanh %228 : vector<8x128xf32>
    %230 = arith.mulf %229, %15 : vector<8x128xf32>
    %231 = arith.addf %230, %18 : vector<8x128xf32>
    %232 = vector.extract_strided_slice %231 {offsets = [0, 0], sizes = [8, 32], strides = [1, 1]} : vector<8x128xf32> to vector<8x32xf32>
    %233 = vector.extract_strided_slice %231 {offsets = [0, 32], sizes = [8, 32], strides = [1, 1]} : vector<8x128xf32> to vector<8x32xf32>
    %234 = vector.extract_strided_slice %231 {offsets = [0, 64], sizes = [8, 32], strides = [1, 1]} : vector<8x128xf32> to vector<8x32xf32>
    %235 = vector.extract_strided_slice %231 {offsets = [0, 96], sizes = [8, 32], strides = [1, 1]} : vector<8x128xf32> to vector<8x32xf32>
    %236 = arith.mulf %233, %199 : vector<8x32xf32>
    %237 = arith.mulf %232, %234 : vector<8x32xf32>
    %238 = arith.addf %236, %237 : vector<8x32xf32>
    %239 = math.tanh %238 : vector<8x32xf32>
    %240 = arith.mulf %235, %239 : vector<8x32xf32>
    %241 = arith.truncf %216 : vector<8x32xf32> to vector<8x32xbf16>
    %cst_54 = arith.constant dense<0.000000e+00> : vector<8x128xf32>
    %242 = tpu.matmul %241, %20, %cst_54 {dimension_numbers = #tpu.dot_dimension_numbers<[1], [0], [0], [1], [0, 0, 1, 1], [], []>} : vector<8x32xbf16>, vector<32x128xbf16>, vector<8x128xf32> -> vector<8x128xf32>
    %243 = arith.addf %225, %242 : vector<8x128xf32>
    %244 = math.tanh %243 : vector<8x128xf32>
    %245 = arith.mulf %244, %15 : vector<8x128xf32>
    %246 = arith.addf %245, %18 : vector<8x128xf32>
    %247 = vector.extract_strided_slice %246 {offsets = [0, 0], sizes = [8, 32], strides = [1, 1]} : vector<8x128xf32> to vector<8x32xf32>
    %248 = vector.extract_strided_slice %246 {offsets = [0, 32], sizes = [8, 32], strides = [1, 1]} : vector<8x128xf32> to vector<8x32xf32>
    %249 = vector.extract_strided_slice %246 {offsets = [0, 64], sizes = [8, 32], strides = [1, 1]} : vector<8x128xf32> to vector<8x32xf32>
    %250 = vector.extract_strided_slice %246 {offsets = [0, 96], sizes = [8, 32], strides = [1, 1]} : vector<8x128xf32> to vector<8x32xf32>
    %251 = arith.mulf %248, %214 : vector<8x32xf32>
    %252 = arith.mulf %247, %249 : vector<8x32xf32>
    %253 = arith.addf %251, %252 : vector<8x32xf32>
    %254 = math.tanh %253 : vector<8x32xf32>
    %255 = arith.mulf %250, %254 : vector<8x32xf32>
    %c6_i32 = arith.constant 6 : i32
    %c8_i32_55 = arith.constant 8 : i32
    %256 = arith.muli %c6_i32, %c8_i32_55 : i32
    %257 = tpu.assume_multiple %256, 8 : i32
    %c7_i32_56 = arith.constant 7 : i32
    %258 = arith.subi %c7_i32_56, %c6_i32 : i32
    %c8_i32_57 = arith.constant 8 : i32
    %259 = arith.muli %258, %c8_i32_57 : i32
    %260 = tpu.assume_multiple %259, 8 : i32
    %261 = arith.index_cast %257 : i32 to index
    %c0_58 = arith.constant 0 : index
    %262 = vector.load %arg8[%261, %c0_58] : memref<64x256xf32, #tpu.memory_space<vmem>>, vector<8x128xf32>
    %263 = arith.index_cast %260 : i32 to index
    %c128_59 = arith.constant 128 : index
    %264 = vector.load %arg8[%263, %c128_59] : memref<64x256xf32, #tpu.memory_space<vmem>>, vector<8x128xf32>
    %265 = arith.truncf %240 : vector<8x32xf32> to vector<8x32xbf16>
    %cst_60 = arith.constant dense<0.000000e+00> : vector<8x128xf32>
    %266 = tpu.matmul %265, %19, %cst_60 {dimension_numbers = #tpu.dot_dimension_numbers<[1], [0], [0], [1], [0, 0, 1, 1], [], []>} : vector<8x32xbf16>, vector<32x128xbf16>, vector<8x128xf32> -> vector<8x128xf32>
    %267 = arith.addf %262, %266 : vector<8x128xf32>
    %268 = math.tanh %267 : vector<8x128xf32>
    %269 = arith.mulf %268, %15 : vector<8x128xf32>
    %270 = arith.addf %269, %18 : vector<8x128xf32>
    %271 = vector.extract_strided_slice %270 {offsets = [0, 0], sizes = [8, 32], strides = [1, 1]} : vector<8x128xf32> to vector<8x32xf32>
    %272 = vector.extract_strided_slice %270 {offsets = [0, 32], sizes = [8, 32], strides = [1, 1]} : vector<8x128xf32> to vector<8x32xf32>
    %273 = vector.extract_strided_slice %270 {offsets = [0, 64], sizes = [8, 32], strides = [1, 1]} : vector<8x128xf32> to vector<8x32xf32>
    %274 = vector.extract_strided_slice %270 {offsets = [0, 96], sizes = [8, 32], strides = [1, 1]} : vector<8x128xf32> to vector<8x32xf32>
    %275 = arith.mulf %272, %238 : vector<8x32xf32>
    %276 = arith.mulf %271, %273 : vector<8x32xf32>
    %277 = arith.addf %275, %276 : vector<8x32xf32>
    %278 = math.tanh %277 : vector<8x32xf32>
    %279 = arith.mulf %274, %278 : vector<8x32xf32>
    %280 = arith.truncf %255 : vector<8x32xf32> to vector<8x32xbf16>
    %cst_61 = arith.constant dense<0.000000e+00> : vector<8x128xf32>
    %281 = tpu.matmul %280, %20, %cst_61 {dimension_numbers = #tpu.dot_dimension_numbers<[1], [0], [0], [1], [0, 0, 1, 1], [], []>} : vector<8x32xbf16>, vector<32x128xbf16>, vector<8x128xf32> -> vector<8x128xf32>
    %282 = arith.addf %264, %281 : vector<8x128xf32>
    %283 = math.tanh %282 : vector<8x128xf32>
    %284 = arith.mulf %283, %15 : vector<8x128xf32>
    %285 = arith.addf %284, %18 : vector<8x128xf32>
    %286 = vector.extract_strided_slice %285 {offsets = [0, 0], sizes = [8, 32], strides = [1, 1]} : vector<8x128xf32> to vector<8x32xf32>
    %287 = vector.extract_strided_slice %285 {offsets = [0, 32], sizes = [8, 32], strides = [1, 1]} : vector<8x128xf32> to vector<8x32xf32>
    %288 = vector.extract_strided_slice %285 {offsets = [0, 64], sizes = [8, 32], strides = [1, 1]} : vector<8x128xf32> to vector<8x32xf32>
    %289 = vector.extract_strided_slice %285 {offsets = [0, 96], sizes = [8, 32], strides = [1, 1]} : vector<8x128xf32> to vector<8x32xf32>
    %290 = arith.mulf %287, %253 : vector<8x32xf32>
    %291 = arith.mulf %286, %288 : vector<8x32xf32>
    %292 = arith.addf %290, %291 : vector<8x32xf32>
    %293 = math.tanh %292 : vector<8x32xf32>
    %294 = arith.mulf %289, %293 : vector<8x32xf32>
    %c7_i32_62 = arith.constant 7 : i32
    %c8_i32_63 = arith.constant 8 : i32
    %295 = arith.muli %c7_i32_62, %c8_i32_63 : i32
    %296 = tpu.assume_multiple %295, 8 : i32
    %c7_i32_64 = arith.constant 7 : i32
    %297 = arith.subi %c7_i32_64, %c7_i32_62 : i32
    %c8_i32_65 = arith.constant 8 : i32
    %298 = arith.muli %297, %c8_i32_65 : i32
    %299 = tpu.assume_multiple %298, 8 : i32
    %300 = arith.index_cast %296 : i32 to index
    %c0_66 = arith.constant 0 : index
    %301 = vector.load %arg8[%300, %c0_66] : memref<64x256xf32, #tpu.memory_space<vmem>>, vector<8x128xf32>
    %302 = arith.index_cast %299 : i32 to index
    %c128_67 = arith.constant 128 : index
    %303 = vector.load %arg8[%302, %c128_67] : memref<64x256xf32, #tpu.memory_space<vmem>>, vector<8x128xf32>
    %304 = arith.truncf %279 : vector<8x32xf32> to vector<8x32xbf16>
    %cst_68 = arith.constant dense<0.000000e+00> : vector<8x128xf32>
    %305 = tpu.matmul %304, %19, %cst_68 {dimension_numbers = #tpu.dot_dimension_numbers<[1], [0], [0], [1], [0, 0, 1, 1], [], []>} : vector<8x32xbf16>, vector<32x128xbf16>, vector<8x128xf32> -> vector<8x128xf32>
    %306 = arith.addf %301, %305 : vector<8x128xf32>
    %307 = math.tanh %306 : vector<8x128xf32>
    %308 = arith.mulf %307, %15 : vector<8x128xf32>
    %309 = arith.addf %308, %18 : vector<8x128xf32>
    %310 = vector.extract_strided_slice %309 {offsets = [0, 0], sizes = [8, 32], strides = [1, 1]} : vector<8x128xf32> to vector<8x32xf32>
    %311 = vector.extract_strided_slice %309 {offsets = [0, 32], sizes = [8, 32], strides = [1, 1]} : vector<8x128xf32> to vector<8x32xf32>
    %312 = vector.extract_strided_slice %309 {offsets = [0, 64], sizes = [8, 32], strides = [1, 1]} : vector<8x128xf32> to vector<8x32xf32>
    %313 = vector.extract_strided_slice %309 {offsets = [0, 96], sizes = [8, 32], strides = [1, 1]} : vector<8x128xf32> to vector<8x32xf32>
    %314 = arith.mulf %311, %277 : vector<8x32xf32>
    %315 = arith.mulf %310, %312 : vector<8x32xf32>
    %316 = arith.addf %314, %315 : vector<8x32xf32>
    %317 = math.tanh %316 : vector<8x32xf32>
    %318 = arith.mulf %313, %317 : vector<8x32xf32>
    %319 = arith.truncf %294 : vector<8x32xf32> to vector<8x32xbf16>
    %cst_69 = arith.constant dense<0.000000e+00> : vector<8x128xf32>
    %320 = tpu.matmul %319, %20, %cst_69 {dimension_numbers = #tpu.dot_dimension_numbers<[1], [0], [0], [1], [0, 0, 1, 1], [], []>} : vector<8x32xbf16>, vector<32x128xbf16>, vector<8x128xf32> -> vector<8x128xf32>
    %321 = arith.addf %303, %320 : vector<8x128xf32>
    %322 = math.tanh %321 : vector<8x128xf32>
    %323 = arith.mulf %322, %15 : vector<8x128xf32>
    %324 = arith.addf %323, %18 : vector<8x128xf32>
    %325 = vector.extract_strided_slice %324 {offsets = [0, 0], sizes = [8, 32], strides = [1, 1]} : vector<8x128xf32> to vector<8x32xf32>
    %326 = vector.extract_strided_slice %324 {offsets = [0, 32], sizes = [8, 32], strides = [1, 1]} : vector<8x128xf32> to vector<8x32xf32>
    %327 = vector.extract_strided_slice %324 {offsets = [0, 64], sizes = [8, 32], strides = [1, 1]} : vector<8x128xf32> to vector<8x32xf32>
    %328 = vector.extract_strided_slice %324 {offsets = [0, 96], sizes = [8, 32], strides = [1, 1]} : vector<8x128xf32> to vector<8x32xf32>
    %329 = arith.mulf %326, %292 : vector<8x32xf32>
    %330 = arith.mulf %325, %327 : vector<8x32xf32>
    %331 = arith.addf %329, %330 : vector<8x32xf32>
    %332 = math.tanh %331 : vector<8x32xf32>
    %333 = arith.mulf %328, %332 : vector<8x32xf32>
    %c8_i32_70 = arith.constant 8 : i32
    %cst_71 = arith.constant 0.000000e+00 : f32
    %334 = vector.broadcast %cst_71 : f32 to vector<2x1xf32>
    %335 = vector.extract_strided_slice %318 {offsets = [0, 0], sizes = [2, 32], strides = [1, 1]} : vector<8x32xf32> to vector<2x32xf32>
    %c0_72 = arith.constant 0 : index
    %c0_73 = arith.constant 0 : index
    %336 = vector.load %arg5[%c0_72, %c0_73] : memref<256x1xf32, #tpu.memory_space<vmem>>, vector<32x1xf32>
    %cst_74 = arith.constant dense<0.000000e+00> : vector<2x1xf32>
    %337 = tpu.matmul %335, %336, %cst_74 {dimension_numbers = #tpu.dot_dimension_numbers<[1], [0], [0], [1], [0, 0, 1, 1], [], []>} : vector<2x32xf32>, vector<32x1xf32>, vector<2x1xf32> -> vector<2x1xf32>
    %338 = arith.addf %334, %337 : vector<2x1xf32>
    %339 = vector.extract_strided_slice %333 {offsets = [0, 0], sizes = [2, 32], strides = [1, 1]} : vector<8x32xf32> to vector<2x32xf32>
    %c32 = arith.constant 32 : index
    %c0_75 = arith.constant 0 : index
    %340 = vector.load %arg5[%c32, %c0_75] : memref<256x1xf32, #tpu.memory_space<vmem>>, vector<32x1xf32>
    %cst_76 = arith.constant dense<0.000000e+00> : vector<2x1xf32>
    %341 = tpu.matmul %339, %340, %cst_76 {dimension_numbers = #tpu.dot_dimension_numbers<[1], [0], [0], [1], [0, 0, 1, 1], [], []>} : vector<2x32xf32>, vector<32x1xf32>, vector<2x1xf32> -> vector<2x1xf32>
    %342 = arith.addf %338, %341 : vector<2x1xf32>
    %343 = vector.extract_strided_slice %318 {offsets = [2, 0], sizes = [2, 32], strides = [1, 1]} : vector<8x32xf32> to vector<2x32xf32>
    %c64 = arith.constant 64 : index
    %c0_77 = arith.constant 0 : index
    %344 = vector.load %arg5[%c64, %c0_77] : memref<256x1xf32, #tpu.memory_space<vmem>>, vector<32x1xf32>
    %cst_78 = arith.constant dense<0.000000e+00> : vector<2x1xf32>
    %345 = tpu.matmul %343, %344, %cst_78 {dimension_numbers = #tpu.dot_dimension_numbers<[1], [0], [0], [1], [0, 0, 1, 1], [], []>} : vector<2x32xf32>, vector<32x1xf32>, vector<2x1xf32> -> vector<2x1xf32>
    %346 = arith.addf %342, %345 : vector<2x1xf32>
    %347 = vector.extract_strided_slice %333 {offsets = [2, 0], sizes = [2, 32], strides = [1, 1]} : vector<8x32xf32> to vector<2x32xf32>
    %c96 = arith.constant 96 : index
    %c0_79 = arith.constant 0 : index
    %348 = vector.load %arg5[%c96, %c0_79] : memref<256x1xf32, #tpu.memory_space<vmem>>, vector<32x1xf32>
    %cst_80 = arith.constant dense<0.000000e+00> : vector<2x1xf32>
    %349 = tpu.matmul %347, %348, %cst_80 {dimension_numbers = #tpu.dot_dimension_numbers<[1], [0], [0], [1], [0, 0, 1, 1], [], []>} : vector<2x32xf32>, vector<32x1xf32>, vector<2x1xf32> -> vector<2x1xf32>
    %350 = arith.addf %346, %349 : vector<2x1xf32>
    %351 = vector.extract_strided_slice %318 {offsets = [4, 0], sizes = [2, 32], strides = [1, 1]} : vector<8x32xf32> to vector<2x32xf32>
    %c128_81 = arith.constant 128 : index
    %c0_82 = arith.constant 0 : index
    %352 = vector.load %arg5[%c128_81, %c0_82] : memref<256x1xf32, #tpu.memory_space<vmem>>, vector<32x1xf32>
    %cst_83 = arith.constant dense<0.000000e+00> : vector<2x1xf32>
    %353 = tpu.matmul %351, %352, %cst_83 {dimension_numbers = #tpu.dot_dimension_numbers<[1], [0], [0], [1], [0, 0, 1, 1], [], []>} : vector<2x32xf32>, vector<32x1xf32>, vector<2x1xf32> -> vector<2x1xf32>
    %354 = arith.addf %350, %353 : vector<2x1xf32>
    %355 = vector.extract_strided_slice %333 {offsets = [4, 0], sizes = [2, 32], strides = [1, 1]} : vector<8x32xf32> to vector<2x32xf32>
    %c160 = arith.constant 160 : index
    %c0_84 = arith.constant 0 : index
    %356 = vector.load %arg5[%c160, %c0_84] : memref<256x1xf32, #tpu.memory_space<vmem>>, vector<32x1xf32>
    %cst_85 = arith.constant dense<0.000000e+00> : vector<2x1xf32>
    %357 = tpu.matmul %355, %356, %cst_85 {dimension_numbers = #tpu.dot_dimension_numbers<[1], [0], [0], [1], [0, 0, 1, 1], [], []>} : vector<2x32xf32>, vector<32x1xf32>, vector<2x1xf32> -> vector<2x1xf32>
    %358 = arith.addf %354, %357 : vector<2x1xf32>
    %359 = vector.extract_strided_slice %318 {offsets = [6, 0], sizes = [2, 32], strides = [1, 1]} : vector<8x32xf32> to vector<2x32xf32>
    %c192 = arith.constant 192 : index
    %c0_86 = arith.constant 0 : index
    %360 = vector.load %arg5[%c192, %c0_86] : memref<256x1xf32, #tpu.memory_space<vmem>>, vector<32x1xf32>
    %cst_87 = arith.constant dense<0.000000e+00> : vector<2x1xf32>
    %361 = tpu.matmul %359, %360, %cst_87 {dimension_numbers = #tpu.dot_dimension_numbers<[1], [0], [0], [1], [0, 0, 1, 1], [], []>} : vector<2x32xf32>, vector<32x1xf32>, vector<2x1xf32> -> vector<2x1xf32>
    %362 = arith.addf %358, %361 : vector<2x1xf32>
    %363 = vector.extract_strided_slice %333 {offsets = [6, 0], sizes = [2, 32], strides = [1, 1]} : vector<8x32xf32> to vector<2x32xf32>
    %c224 = arith.constant 224 : index
    %c0_88 = arith.constant 0 : index
    %364 = vector.load %arg5[%c224, %c0_88] : memref<256x1xf32, #tpu.memory_space<vmem>>, vector<32x1xf32>
    %cst_89 = arith.constant dense<0.000000e+00> : vector<2x1xf32>
    %365 = tpu.matmul %363, %364, %cst_89 {dimension_numbers = #tpu.dot_dimension_numbers<[1], [0], [0], [1], [0, 0, 1, 1], [], []>} : vector<2x32xf32>, vector<32x1xf32>, vector<2x1xf32> -> vector<2x1xf32>
    %366 = arith.addf %362, %365 : vector<2x1xf32>
    %c0_90 = arith.constant 0 : index
    %c0_91 = arith.constant 0 : index
    %367 = vector.load %arg6[%c0_90, %c0_91] : memref<1x1xf32, #tpu.memory_space<vmem>>, vector<1x1xf32>
    %368 = vector.broadcast %367 : vector<1x1xf32> to vector<2x1xf32>
    %369 = arith.addf %366, %368 : vector<2x1xf32>
    %370 = arith.negf %369 : vector<2x1xf32>
    %371 = math.exp %370 : vector<2x1xf32>
    %cst_92 = arith.constant 1.000000e+00 : f32
    %372 = vector.broadcast %cst_92 : f32 to vector<2x1xf32>
    %373 = arith.addf %372, %371 : vector<2x1xf32>
    %374 = arith.divf %372, %373 : vector<2x1xf32>
    %c0_93 = arith.constant 0 : index
    %c0_94 = arith.constant 0 : index
    %375 = vector.load %arg7[%c0_93, %c0_94] : memref<2x1xf32, #tpu.memory_space<vmem>>, vector<2x1xf32>
    tpu.vector_store %arg7[%c0_93, %c0_94], %374 {strides = array<i32>} : memref<2x1xf32, #tpu.memory_space<vmem>>, vector<2x1xf32>,
    return
  }
}

</mosaic_0001>

<llo_original>
// kernel: mul.26
$region0: #{mul.26}
  #allocation0 [shape = 's32[1]{0}', space=sflag, size = 0x4, scoped, tag = 'scoped memory for mul.26']
  %s0 = inlined_call_operand.vmem [shape: f32[1,256], index: 0, kind: input, shape index: {}]
  %s1 = inlined_call_operand.vmem [shape: f32[1,256], index: 1, kind: input, shape index: {}]
  %s2 = inlined_call_operand.vmem [shape: f32[1,256], index: 2, kind: output, shape index: {}]
  %v3 = vld [vmem:[%s0] sm:$0x1]
  %v4 = vld [vmem:[%s1] sm:$0x1]
  %5 = xla_tuple %v3, %v4
  %6 = xla_tuple %5
  %v7 = vmul.f32 %v3, %v4
  %8 = xla_tuple %v7
  %9 = vst [vmem:[%s2] sm:$0x1] %v7
  %s10 = scalar_lea.vmem %s0, 1
  %v11 = vld [vmem:[%s10] sm:$0x1]
  %s12 = scalar_lea.vmem %s1, 1
  %v13 = vld [vmem:[%s12] sm:$0x1]
  %14 = xla_tuple %v11, %v13
  %15 = xla_tuple %14
  %v16 = vmul.f32 %v11, %v13
  %17 = xla_tuple %v16
  %s18 = scalar_lea.vmem %s2, 1
  %19 = vst [vmem:[%s18] sm:$0x1] %v16

// kernel: news_model_forward.1
$region0: #{news_model_forward.1}
  #allocation0 [shape = 'u32[]', space=smem, size = 0x4, offset = 0x4, fixed_abs, tag = 'smem constant byte address 0x4 - core index']
  #allocation1 [shape = 'u32[144,128]{1,0:T(1,128)}', space=vmem, size = 0x12000, scoped, tag = 'internal scratch']
  #allocation2 [shape = 'f32[64,256]{1,0:T(8,128)}', space=vmem, size = 0x10000, scoped, tag = 'scratch operand']
  #allocation3 [shape = 'f32[1,1]{1,0:T(1,128)S(1)}', space=vmem, size = 0x200, scoped, tag = 'scoped memory for news_model_forward.1']
  %s0 = inlined_call_operand.vmem [shape: bf16[64,300], index: 0, kind: input, shape index: {}]
  %s1 = inlined_call_operand.vmem [shape: bf16[300,256], index: 1, kind: input, shape index: {}]
  %s2 = inlined_call_operand.vmem [shape: bf16[32,128], index: 2, kind: input, shape index: {}]
  %s3 = inlined_call_operand.vmem [shape: bf16[32,128], index: 3, kind: input, shape index: {}]
  %s4 = inlined_call_operand.vmem [shape: f32[1,256], index: 4, kind: input, shape index: {}]
  %s5 = inlined_call_operand.vmem [shape: f32[256,1], index: 5, kind: input, shape index: {}]
  %s6 = inlined_call_operand.<no memory space> [shape: f32[1,1], index: 6, kind: input, shape index: {}]
  %s7 = inlined_call_operand.vmem [shape: f32[2,1], index: 7, kind: output, shape index: {}]
  %s8 = sld [smem:[#allocation0]]
  $region38: #{news_model_forward.1} parent=0
    _
  %s10 = ssub.s32 1, %s8
  %s11 = scalar_select 0, %s10, %s8
  %v12 = vstv %s6
  %13 = vst [vmem:[#allocation3] sm:$0x1] %v12
  // Predicated region
  $region2: #{news_model_forward.1} parent=0 // pred_check
    _
  $region3: #{news_model_forward.1} parent=0 // pred_check_branch
    %15 = sbr.rel (0) target = $region5
  $region4: #{news_model_forward.1} parent=0 // pred_region
    _
  $region5: #{news_model_forward.1} parent=0 // pred_fallthru
    _
  // Predicated region
  $region6: #{news_model_forward.1} parent=0 // pred_check
    _
  $region7: #{news_model_forward.1} parent=0 // pred_check_branch
    %17 = sbr.rel (0) target = $region9
  $region8: #{news_model_forward.1} parent=0 // pred_region
    _
  $region9: #{news_model_forward.1} parent=0 // pred_fallthru
    _
  // Predicated region
  $region10: #{news_model_forward.1} parent=0 // pred_check
    _
  $region11: #{news_model_forward.1} parent=0 // pred_check_branch
    %19 = sbr.rel (0) target = $region13
  $region12: #{news_model_forward.1} parent=0 // pred_region
    _
  $region13: #{news_model_forward.1} parent=0 // pred_fallthru
    _
  // Predicated region
  $region14: #{news_model_forward.1} parent=0 // pred_check
    _
  $region15: #{news_model_forward.1} parent=0 // pred_check_branch
    %21 = sbr.rel (0) target = $region17
  $region16: #{news_model_forward.1} parent=0 // pred_region
    _
  $region17: #{news_model_forward.1} parent=0 // pred_fallthru
    _
  // Predicated region
  $region18: #{news_model_forward.1} parent=0 // pred_check
    _
  $region19: #{news_model_forward.1} parent=0 // pred_check_branch
    %23 = sbr.rel (0) target = $region21
  $region20: #{news_model_forward.1} parent=0 // pred_region
    _
  $region21: #{news_model_forward.1} parent=0 // pred_fallthru
    _
  // Predicated region
  $region22: #{news_model_forward.1} parent=0 // pred_check
    _
  $region23: #{news_model_forward.1} parent=0 // pred_check_branch
    %25 = sbr.rel (0) target = $region25
  $region24: #{news_model_forward.1} parent=0 // pred_region
    _
  $region25: #{news_model_forward.1} parent=0 // pred_fallthru
    _
  // Predicated region
  $region26: #{news_model_forward.1} parent=0 // pred_check
    _
  $region27: #{news_model_forward.1} parent=0 // pred_check_branch
    %27 = sbr.rel (0) target = $region29
  $region28: #{news_model_forward.1} parent=0 // pred_region
    _
  $region29: #{news_model_forward.1} parent=0 // pred_fallthru
    _
  %v29 = vld [vmem:[%s0] sm:$0xff]
  %v30 = vld [vmem:[%s0 + $0x8] sm:$0xf]
  %v31 = vld [vmem:[%s0 + $0xc] sm:$0xff]
  %v32 = vld [vmem:[%s0 + $0x14] sm:$0xf]
  %v33 = vld [vmem:[%s0 + $0x18] sm:$0xff]
  %v34 = vld [vmem:[%s0 + $0x20] sm:$0xf]
  %v35 = vld [vmem:[%s0 + $0x24] sm:$0xff]
  %v36 = vld [vmem:[%s0 + $0x2c] sm:$0xf]
  %v37 = vld [vmem:[%s0 + $0x30] sm:$0xff]
  %v38 = vld [vmem:[%s0 + $0x38] sm:$0xf]
  %v39 = vld [vmem:[%s0 + $0x3c] sm:$0xff]
  %v40 = vld [vmem:[%s0 + $0x44] sm:$0xf]
  %v41 = vld [vmem:[%s0 + $0x48] sm:$0xff]
  %v42 = vld [vmem:[%s0 + $0x50] sm:$0xf]
  %v43 = vld [vmem:[%s0 + $0x54] sm:$0xff]
  %v44 = vld [vmem:[%s0 + $0x5c] sm:$0xf]
  %v45 = vld [vmem:[%s1] sm:$0xff]
  %v46 = vld [vmem:[%s1 + $0x8] sm:$0xff]
  %v47 = vld [vmem:[%s1 + $0x10] sm:$0xff]
  %v48 = vld [vmem:[%s1 + $0x18] sm:$0xff]
  %v49 = vld [vmem:[%s1 + $0x20] sm:$0xff]
  %v50 = vld [vmem:[%s1 + $0x28] sm:$0xff]
  %v51 = vld [vmem:[%s1 + $0x30] sm:$0xff]
  %v52 = vld [vmem:[%s1 + $0x38] sm:$0xff]
  %v53 = vld [vmem:[%s1 + $0x40] sm:$0xff]
  %v54 = vld [vmem:[%s1 + $0x48] sm:$0xff]
  %v55 = vld [vmem:[%s1 + $0x50] sm:$0xff]
  %v56 = vld [vmem:[%s1 + $0x58] sm:$0xff]
  %v57 = vld [vmem:[%s1 + $0x60] sm:$0xff]
  %v58 = vld [vmem:[%s1 + $0x68] sm:$0xff]
  %v59 = vld [vmem:[%s1 + $0x70] sm:$0xff]
  %v60 = vld [vmem:[%s1 + $0x78] sm:$0xff]
  %v61 = vld [vmem:[%s1 + $0x80] sm:$0xff]
  %v62 = vld [vmem:[%s1 + $0x88] sm:$0xff]
  %v63 = vld [vmem:[%s1 + $0x90] sm:$0xff]
  %v64 = vld [vmem:[%s1 + $0x98] sm:$0xff]
  %v65 = vld [vmem:[%s1 + $0xa0] sm:$0xff]
  %v66 = vld [vmem:[%s1 + $0xa8] sm:$0xff]
  %v67 = vld [vmem:[%s1 + $0xb0] sm:$0xff]
  %v68 = vld [vmem:[%s1 + $0xb8] sm:$0xff]
  %v69 = vld [vmem:[%s1 + $0xc0] sm:$0xff]
  %v70 = vld [vmem:[%s1 + $0xc8] sm:$0xff]
  %v71 = vld [vmem:[%s1 + $0xd0] sm:$0xff]
  %v72 = vld [vmem:[%s1 + $0xd8] sm:$0xff]
  %v73 = vld [vmem:[%s1 + $0xe0] sm:$0xff]
  %v74 = vld [vmem:[%s1 + $0xe8] sm:$0xff]
  %v75 = vld [vmem:[%s1 + $0xf0] sm:$0xff]
  %v76 = vld [vmem:[%s1 + $0xf8] sm:$0xff]
  %v77 = vld [vmem:[%s1 + $0x100] sm:$0xff]
  %v78 = vld [vmem:[%s1 + $0x108] sm:$0xff]
  %v79 = vld [vmem:[%s1 + $0x110] sm:$0xff]
  %v80 = vld [vmem:[%s1 + $0x118] sm:$0xff]
  %v81 = vld [vmem:[%s1 + $0x120] sm:$0xff]
  %v82 = vld [vmem:[%s1 + $0x128] sm:$0x33]
  %v83 = vld [vmem:[%s4] sm:$0x3]
  %v85 = vlaneseq
  %v86 = vshrl.u32 %v85, 7
  %v87 = vsub.s32 0, %v86
  %v88 = vrot.slane %v83, %v87
  %v89 = vlaneseq
  %v90 = vshrl.u32 %v89, 7
  %v91 = vsub.s32 1, %v90
  %v92 = vrot.slane %v83, %v91
  %v111 = vunpack.c.l.b16 %v29
  %v112 = vunpack.c.h.b16 %v29
  %v113 = vunpack.c.l.b16 %v30
  %v114 = vunpack.c.l.b16 %v31
  %v115 = vunpack.c.h.b16 %v31
  %v116 = vunpack.c.l.b16 %v32
  %v117 = vunpack.c.l.b16 %v33
  %v118 = vunpack.c.h.b16 %v33
  %v119 = vunpack.c.l.b16 %v34
  %v120 = vunpack.c.l.b16 %v35
  %v121 = vunpack.c.h.b16 %v35
  %v122 = vunpack.c.l.b16 %v36
  %v123 = vunpack.c.l.b16 %v37
  %v124 = vunpack.c.h.b16 %v37
  %v125 = vunpack.c.l.b16 %v38
  %v126 = vunpack.c.l.b16 %v39
  %v127 = vunpack.c.h.b16 %v39
  %v128 = vunpack.c.l.b16 %v40
  %v129 = vunpack.c.l.b16 %v41
  %v130 = vunpack.c.h.b16 %v41
  %v131 = vunpack.c.l.b16 %v42
  %v132 = vunpack.c.l.b16 %v43
  %v133 = vunpack.c.h.b16 %v43
  %v134 = vunpack.c.l.b16 %v44
  %v135 = vpack.c.b16 %v114, %v111
  %v136 = vpack.c.b16 %v115, %v112
  %v137 = vpack.c.b16 %v116, %v113
  %v138 = vpack.c.b16 %v120, %v117
  %v139 = vpack.c.b16 %v121, %v118
  %v140 = vpack.c.b16 %v122, %v119
  %v141 = vpack.c.b16 %v126, %v123
  %v142 = vpack.c.b16 %v127, %v124
  %v143 = vpack.c.b16 %v128, %v125
  %v144 = vpack.c.b16 %v132, %v129
  %v145 = vpack.c.b16 %v133, %v130
  %v146 = vpack.c.b16 %v134, %v131
  %v193 = vunpack.c.l.b16 %v45
  %v194 = vunpack.c.h.b16 %v45
  %v195 = vunpack.c.l.b16 %v46
  %v196 = vunpack.c.h.b16 %v46
  %v197 = vunpack.c.l.b16 %v47
  %v198 = vunpack.c.h.b16 %v47
  %v199 = vunpack.c.l.b16 %v48
  %v200 = vunpack.c.h.b16 %v48
  %v201 = vunpack.c.l.b16 %v49
  %v202 = vunpack.c.h.b16 %v49
  %v203 = vunpack.c.l.b16 %v50
  %v204 = vunpack.c.h.b16 %v50
  %v205 = vunpack.c.l.b16 %v51
  %v206 = vunpack.c.h.b16 %v51
  %v207 = vunpack.c.l.b16 %v52
  %v208 = vunpack.c.h.b16 %v52
  %v209 = vunpack.c.l.b16 %v53
  %v210 = vunpack.c.h.b16 %v53
  %v211 = vunpack.c.l.b16 %v54
  %v212 = vunpack.c.h.b16 %v54
  %v213 = vunpack.c.l.b16 %v55
  %v214 = vunpack.c.h.b16 %v55
  %v215 = vunpack.c.l.b16 %v56
  %v216 = vunpack.c.h.b16 %v56
  %v217 = vunpack.c.l.b16 %v57
  %v218 = vunpack.c.h.b16 %v57
  %v219 = vunpack.c.l.b16 %v58
  %v220 = vunpack.c.h.b16 %v58
  %v221 = vunpack.c.l.b16 %v59
  %v222 = vunpack.c.h.b16 %v59
  %v223 = vunpack.c.l.b16 %v60
  %v224 = vunpack.c.h.b16 %v60
  %v225 = vunpack.c.l.b16 %v61
  %v226 = vunpack.c.h.b16 %v61
  %v227 = vunpack.c.l.b16 %v62
  %v228 = vunpack.c.h.b16 %v62
  %v229 = vunpack.c.l.b16 %v63
  %v230 = vunpack.c.h.b16 %v63
  %v231 = vunpack.c.l.b16 %v64
  %v232 = vunpack.c.h.b16 %v64
  %v233 = vunpack.c.l.b16 %v65
  %v234 = vunpack.c.h.b16 %v65
  %v235 = vunpack.c.l.b16 %v66
  %v236 = vunpack.c.h.b16 %v66
  %v237 = vunpack.c.l.b16 %v67
  %v238 = vunpack.c.h.b16 %v67
  %v239 = vunpack.c.l.b16 %v68
  %v240 = vunpack.c.h.b16 %v68
  %v241 = vunpack.c.l.b16 %v69
  %v242 = vunpack.c.h.b16 %v69
  %v243 = vunpack.c.l.b16 %v70
  %v244 = vunpack.c.h.b16 %v70
  %v245 = vunpack.c.l.b16 %v71
  %v246 = vunpack.c.h.b16 %v71
  %v247 = vunpack.c.l.b16 %v72
  %v248 = vunpack.c.h.b16 %v72
  %v249 = vunpack.c.l.b16 %v73
  %v250 = vunpack.c.h.b16 %v73
  %v251 = vunpack.c.l.b16 %v74
  %v252 = vunpack.c.h.b16 %v74
  %v253 = vunpack.c.l.b16 %v75
  %v254 = vunpack.c.h.b16 %v75
  %v255 = vunpack.c.l.b16 %v76
  %v256 = vunpack.c.h.b16 %v76
  %v257 = vunpack.c.l.b16 %v77
  %v258 = vunpack.c.h.b16 %v77
  %v259 = vunpack.c.l.b16 %v78
  %v260 = vunpack.c.h.b16 %v78
  %v261 = vunpack.c.l.b16 %v79
  %v262 = vunpack.c.h.b16 %v79
  %v263 = vunpack.c.l.b16 %v80
  %v264 = vunpack.c.h.b16 %v80
  %v265 = vunpack.c.l.b16 %v81
  %v266 = vunpack.c.h.b16 %v81
  %v267 = vunpack.c.l.b16 %v82
  %v268 = vunpack.c.h.b16 %v82
  %v269 = vpack.c.b16 %v195, %v193
  %v270 = vpack.c.b16 %v196, %v194
  %v271 = vpack.c.b16 %v199, %v197
  %v272 = vpack.c.b16 %v200, %v198
  %v273 = vpack.c.b16 %v203, %v201
  %v274 = vpack.c.b16 %v204, %v202
  %v275 = vpack.c.b16 %v207, %v205
  %v276 = vpack.c.b16 %v208, %v206
  %v277 = vpack.c.b16 %v211, %v209
  %v278 = vpack.c.b16 %v212, %v210
  %v279 = vpack.c.b16 %v215, %v213
  %v280 = vpack.c.b16 %v216, %v214
  %v281 = vpack.c.b16 %v219, %v217
  %v282 = vpack.c.b16 %v220, %v218
  %v283 = vpack.c.b16 %v223, %v221
  %v284 = vpack.c.b16 %v224, %v222
  %v285 = vpack.c.b16 %v227, %v225
  %v286 = vpack.c.b16 %v228, %v226
  %v287 = vpack.c.b16 %v231, %v229
  %v288 = vpack.c.b16 %v232, %v230
  %v289 = vpack.c.b16 %v235, %v233
  %v290 = vpack.c.b16 %v236, %v234
  %v291 = vpack.c.b16 %v239, %v237
  %v292 = vpack.c.b16 %v240, %v238
  %v293 = vpack.c.b16 %v243, %v241
  %v294 = vpack.c.b16 %v244, %v242
  %v295 = vpack.c.b16 %v247, %v245
  %v296 = vpack.c.b16 %v248, %v246
  %v297 = vpack.c.b16 %v251, %v249
  %v298 = vpack.c.b16 %v252, %v250
  %v299 = vpack.c.b16 %v255, %v253
  %v300 = vpack.c.b16 %v256, %v254
  %v301 = vpack.c.b16 %v259, %v257
  %v302 = vpack.c.b16 %v260, %v258
  %v303 = vpack.c.b16 %v263, %v261
  %v304 = vpack.c.b16 %v264, %v262
  %v305 = vpack.c.b16 %v267, %v265
  %v306 = vpack.c.b16 %v268, %v266
  %vm343 = vcmask 359424
  %v345 = vsel %vm343, %v137, 0
  %v348 = vsel %vm343, %v140, 0
  %v351 = vsel %vm343, %v143, 0
  %v354 = vsel %vm343, %v146, 0
  %vm356 = vcmask 1045504
  %v358 = vsel %vm356, %v305, 0
  %v361 = vsel %vm356, %v306, 0
  %363 = vmatprep.subr.bf16.mxu0 %v284
  %364 = vmatpush1.bf16.msra.mxu0 %v283
  %365 = vmatprep.subr.bf16.mxu0 %v282
  %366 = vmatpush1.bf16.msra.mxu0 %v281
  %367 = vmatprep.subr.bf16.mxu0 %v280
  %368 = vmatpush1.bf16.msra.mxu0 %v279
  %369 = vmatprep.subr.bf16.mxu0 %v278
  %370 = vmatpush1.bf16.msra.mxu0 %v277
  %371 = vmatprep.subr.bf16.mxu0 %v276
  %372 = vmatpush1.bf16.msra.mxu0 %v275
  %373 = vmatprep.subr.bf16.mxu0 %v274
  %374 = vmatpush1.bf16.msra.mxu0 %v273
  %375 = vmatprep.subr.bf16.mxu0 %v272
  %376 = vmatpush1.bf16.msra.mxu0 %v271
  %377 = vmatprep.subr.bf16.mxu0 %v270
  %378 = vmatpush1.bf16.msra.mxu0 %v269
  %379 = vmatprep.subr.bf16.mxu0 %v300
  %380 = vmatpush2.bf16.msra.mxu0 %v299
  %381 = vmatprep.subr.bf16.mxu0 %v298
  %382 = vmatpush2.bf16.msra.mxu0 %v297
  %383 = vmatprep.subr.bf16.mxu0 %v296
  %384 = vmatpush2.bf16.msra.mxu0 %v295
  %385 = vmatprep.subr.bf16.mxu0 %v294
  %386 = vmatpush2.bf16.msra.mxu0 %v293
  %387 = vmatprep.subr.bf16.mxu0 %v292
  %388 = vmatpush2.bf16.msra.mxu0 %v291
  %389 = vmatprep.subr.bf16.mxu0 %v290
  %390 = vmatpush2.bf16.msra.mxu0 %v289
  %391 = vmatprep.subr.bf16.mxu0 %v288
  %392 = vmatpush2.bf16.msra.mxu0 %v287
  %393 = vmatprep.subr.bf16.mxu0 %v286
  %394 = vmatpush2.bf16.msra.mxu0 %v285
  %395 = vmatprep.mubr.bf16.mxu0 %v136
  %396 = vmatmul.mubr.bf16.gmra.mxu0 %v135
  %v397 = vpop.f32.mrf.mxu0
  %v398 = vadd.f32 %v88, %v397
  %v399 = vpop.f32.mrf.mxu0
  %v400 = vadd.f32 %v92, %v399
  %v401 = vpop.f32.mrf.mxu0
  %v402 = vadd.f32 %v88, %v401
  %v403 = vpop.f32.mrf.mxu0
  %v404 = vadd.f32 %v92, %v403
  %405 = vmatprep.mubr.bf16.mxu0 %v139
  %406 = vmatmul.mubr.bf16.gmra.mxu0 %v138
  %v407 = vpop.f32.mrf.mxu0
  %v408 = vadd.f32 %v88, %v407
  %v409 = vpop.f32.mrf.mxu0
  %v410 = vadd.f32 %v92, %v409
  %v411 = vpop.f32.mrf.mxu0
  %v412 = vadd.f32 %v88, %v411
  %v413 = vpop.f32.mrf.mxu0
  %v414 = vadd.f32 %v92, %v413
  %415 = vmatprep.mubr.bf16.mxu0 %v142
  %416 = vmatmul.mubr.bf16.gmra.mxu0 %v141
  %v417 = vpop.f32.mrf.mxu0
  %v418 = vadd.f32 %v88, %v417
  %v419 = vpop.f32.mrf.mxu0
  %v420 = vadd.f32 %v92, %v419
  %v421 = vpop.f32.mrf.mxu0
  %v422 = vadd.f32 %v88, %v421
  %v423 = vpop.f32.mrf.mxu0
  %v424 = vadd.f32 %v92, %v423
  %425 = vmatprep.mubr.bf16.mxu0 %v145
  %426 = vmatmul.mubr.bf16.gmra.mxu0 %v144
  %v427 = vpop.f32.mrf.mxu0
  %v428 = vadd.f32 %v88, %v427
  %v429 = vpop.f32.mrf.mxu0
  %v430 = vadd.f32 %v92, %v429
  %v431 = vpop.f32.mrf.mxu0
  %v432 = vadd.f32 %v88, %v431
  %v433 = vpop.f32.mrf.mxu0
  %v434 = vadd.f32 %v92, %v433
  %435 = vdwg.mxu0
  %436 = vmatprep.subr.bf16.mxu0 0
  %437 = vmatpush1.bf16.msra.mxu0 0
  %438 = vmatprep.subr.bf16.mxu0 0
  %439 = vmatpush1.bf16.msra.mxu0 0
  %440 = vmatprep.subr.bf16.mxu0 0
  %441 = vmatpush1.bf16.msra.mxu0 0
  %442 = vmatprep.subr.bf16.mxu0 0
  %443 = vmatpush1.bf16.msra.mxu0 0
  %444 = vmatprep.subr.bf16.mxu0 0
  %445 = vmatpush1.bf16.msra.mxu0 0
  %446 = vmatprep.subr.bf16.mxu0 %v361
  %447 = vmatpush1.bf16.msra.mxu0 %v358
  %448 = vmatprep.subr.bf16.mxu0 %v304
  %449 = vmatpush1.bf16.msra.mxu0 %v303
  %450 = vmatprep.subr.bf16.mxu0 %v302
  %451 = vmatpush1.bf16.msra.mxu0 %v301
  %452 = vmatprep.subr.bf16.mxu0 0
  %453 = vmatpush2.bf16.msra.mxu0 0
  %454 = vmatprep.subr.bf16.mxu0 0
  %455 = vmatpush2.bf16.msra.mxu0 0
  %456 = vmatprep.subr.bf16.mxu0 0
  %457 = vmatpush2.bf16.msra.mxu0 0
  %458 = vmatprep.subr.bf16.mxu0 0
  %459 = vmatpush2.bf16.msra.mxu0 0
  %460 = vmatprep.subr.bf16.mxu0 0
  %461 = vmatpush2.bf16.msra.mxu0 0
  %462 = vmatprep.subr.bf16.mxu0 0
  %463 = vmatpush2.bf16.msra.mxu0 0
  %464 = vmatprep.subr.bf16.mxu0 0
  %465 = vmatpush2.bf16.msra.mxu0 0
  %466 = vmatprep.subr.bf16.mxu0 0
  %467 = vmatpush2.bf16.msra.mxu0 0
  %468 = vmatprep.mubr.bf16.mxu0 0
  %469 = vmatmul.mubr.bf16.gmra.mxu0 %v345
  %v470 = vpop.f32.mrf.mxu0
  %v471 = vadd.f32 %v398, %v470
  %v472 = vpop.f32.mrf.mxu0
  %v473 = vadd.f32 %v400, %v472
  %v474 = vpop.f32.mrf.mxu0
  %v475 = vadd.f32 %v402, %v474
  %v476 = vpop.f32.mrf.mxu0
  %v477 = vadd.f32 %v404, %v476
  %478 = vmatprep.mubr.bf16.mxu0 0
  %479 = vmatmul.mubr.bf16.gmra.mxu0 %v348
  %v480 = vpop.f32.mrf.mxu0
  %v481 = vadd.f32 %v408, %v480
  %v482 = vpop.f32.mrf.mxu0
  %v483 = vadd.f32 %v410, %v482
  %v484 = vpop.f32.mrf.mxu0
  %v485 = vadd.f32 %v412, %v484
  %v486 = vpop.f32.mrf.mxu0
  %v487 = vadd.f32 %v414, %v486
  %488 = vmatprep.mubr.bf16.mxu0 0
  %489 = vmatmul.mubr.bf16.gmra.mxu0 %v351
  %v490 = vpop.f32.mrf.mxu0
  %v491 = vadd.f32 %v418, %v490
  %v492 = vpop.f32.mrf.mxu0
  %v493 = vadd.f32 %v420, %v492
  %v494 = vpop.f32.mrf.mxu0
  %v495 = vadd.f32 %v422, %v494
  %v496 = vpop.f32.mrf.mxu0
  %v497 = vadd.f32 %v424, %v496
  %498 = vmatprep.mubr.bf16.mxu0 0
  %499 = vmatmul.mubr.bf16.gmra.mxu0 %v354
  %v500 = vpop.f32.mrf.mxu0
  %v501 = vadd.f32 %v428, %v500
  %v502 = vpop.f32.mrf.mxu0
  %v503 = vadd.f32 %v430, %v502
  %v504 = vpop.f32.mrf.mxu0
  %v505 = vadd.f32 %v432, %v504
  %v506 = vpop.f32.mrf.mxu0
  %v507 = vadd.f32 %v434, %v506
  %508 = vdwg.mxu0
  %509 = vst [vmem:[#allocation2] sm:$0xff] %v471
  %510 = vst [vmem:[#allocation2 + $0x8] sm:$0xff] %v473
  %511 = vst [vmem:[#allocation2 + $0x10] sm:$0xff] %v475
  %512 = vst [vmem:[#allocation2 + $0x18] sm:$0xff] %v477
  %513 = vst [vmem:[#allocation2 + $0x20] sm:$0xff] %v481
  %514 = vst [vmem:[#allocation2 + $0x28] sm:$0xff] %v483
  %515 = vst [vmem:[#allocation2 + $0x30] sm:$0xff] %v485
  %516 = vst [vmem:[#allocation2 + $0x38] sm:$0xff] %v487
  %517 = vst [vmem:[#allocation2 + $0x40] sm:$0xff] %v491
  %518 = vst [vmem:[#allocation2 + $0x48] sm:$0xff] %v493
  %519 = vst [vmem:[#allocation2 + $0x50] sm:$0xff] %v495
  %520 = vst [vmem:[#allocation2 + $0x58] sm:$0xff] %v497
  %521 = vst [vmem:[#allocation2 + $0x60] sm:$0xff] %v501
  %522 = vst [vmem:[#allocation2 + $0x68] sm:$0xff] %v503
  %523 = vst [vmem:[#allocation2 + $0x70] sm:$0xff] %v505
  %524 = vst [vmem:[#allocation2 + $0x78] sm:$0xff] %v507
  %v525 = vlaneseq
  %v526 = vand.u32 %v525, 127
  %vm527 = vcmp.ge.s32.totalorder %v526, 64
  %vm528 = vcmp.lt.s32.totalorder %v526, 96
  %vm529 = vmand %vm527, %vm528
  %v530 = vsel %vm529, 1.0, 0.5
  %v531 = vsel %vm529, 0.0, 0.5
  %v532 = vld [vmem:[%s2] sm:$0xf]
  %v533 = vld [vmem:[%s2 + $0x4] sm:$0xf]
  %v534 = vld [vmem:[%s2 + $0x8] sm:$0xf]
  %v535 = vld [vmem:[%s2 + $0xc] sm:$0xf]
  %v536 = vld [vmem:[%s3] sm:$0xf]
  %v537 = vld [vmem:[%s3 + $0x4] sm:$0xf]
  %v538 = vld [vmem:[%s3 + $0x8] sm:$0xf]
  %v539 = vld [vmem:[%s3 + $0xc] sm:$0xf]
  %s540 = smul.u32 0, 2
  %s541 = smul.addr %s540, 8
  %s542 = scalar_lea.vmem [#allocation2], %s541
  %v543 = vld [vmem:[%s542] sm:$0xff]
  %s544 = smul.u32 7, 2
  %s545 = smul.addr %s544, 8
  %s546 = scalar_lea.vmem [#allocation2], %s545
  %v547 = vld [vmem:[%s546 + $0x8] sm:$0xff]
  %v552 = vunpack.c.l.b16 %v532
  %v553 = vunpack.c.l.b16 %v533
  %v554 = vunpack.c.l.b16 %v534
  %v555 = vunpack.c.l.b16 %v535
  %v556 = vpack.c.b16 %v553, %v552
  %v557 = vpack.c.b16 %v555, %v554
  %vm560 = vcmask 261120
  %v562 = vsel %vm560, 0, 0
  %564 = vmatprep.subr.bf16.mxu0 0
  %565 = vmatpush1.bf16.msra.mxu0 0
  %566 = vmatprep.subr.bf16.mxu0 0
  %567 = vmatpush1.bf16.msra.mxu0 0
  %568 = vmatprep.subr.bf16.mxu0 0
  %569 = vmatpush1.bf16.msra.mxu0 0
  %570 = vmatprep.subr.bf16.mxu0 0
  %571 = vmatpush1.bf16.msra.mxu0 0
  %572 = vmatprep.subr.bf16.mxu0 0
  %573 = vmatpush1.bf16.msra.mxu0 0
  %574 = vmatprep.subr.bf16.mxu0 0
  %575 = vmatpush1.bf16.msra.mxu0 0
  %576 = vmatprep.subr.bf16.mxu0 0
  %577 = vmatpush1.bf16.msra.mxu0 %v557
  %578 = vmatprep.subr.bf16.mxu0 0
  %579 = vmatpush1.bf16.msra.mxu0 %v556
  %580 = vmatprep.subr.bf16.mxu0 0
  %581 = vmatpush2.bf16.msra.mxu0 0
  %582 = vmatprep.subr.bf16.mxu0 0
  %583 = vmatpush2.bf16.msra.mxu0 0
  %584 = vmatprep.subr.bf16.mxu0 0
  %585 = vmatpush2.bf16.msra.mxu0 0
  %586 = vmatprep.subr.bf16.mxu0 0
  %587 = vmatpush2.bf16.msra.mxu0 0
  %588 = vmatprep.subr.bf16.mxu0 0
  %589 = vmatpush2.bf16.msra.mxu0 0
  %590 = vmatprep.subr.bf16.mxu0 0
  %591 = vmatpush2.bf16.msra.mxu0 0
  %592 = vmatprep.subr.bf16.mxu0 0
  %593 = vmatpush2.bf16.msra.mxu0 0
  %594 = vmatprep.subr.bf16.mxu0 0
  %595 = vmatpush2.bf16.msra.mxu0 0
  %596 = vmatprep.mubr.bf16.mxu0 0
  %597 = vmatmul.mubr.bf16.gmra.mxu0 %v562
  %v598 = vpop.f32.mrf.mxu0
  %v599 = vadd.f32 0.0, %v598
  %v600 = vpop.f32.mrf.mxu0
  %v601 = vpop.f32.mrf.mxu0
  %v602 = vpop.f32.mrf.mxu0
  %603 = vdwg.mxu0
  %v604 = vadd.f32 %v543, %v599
  %v605 = vtanh.pop %v604
  %v606 = vmul.f32 %v605, %v530
  %v607 = vadd.f32 %v606, %v531
  %v608 = vmul.f32 %v607, 0.0
  %610 = vrot.lane.b32.xlu0 %v607, 64
  %v611 = vpop.permute.xlu0 %610
  %v613 = vmul.f32 %v607, %v611
  %615 = vrot.lane.b32.xlu0 %v613, 32
  %v616 = vpop.permute.xlu0 %615
  %v618 = vadd.f32 %v608, %v616
  %v619 = vtanh.pop %v618
  %621 = vrot.lane.b32.xlu0 %v619, 64
  %v622 = vpop.permute.xlu0 %621
  %v624 = vmul.f32 %v607, %v622
  %v629 = vunpack.c.l.b16 %v536
  %v630 = vunpack.c.l.b16 %v537
  %v631 = vunpack.c.l.b16 %v538
  %v632 = vunpack.c.l.b16 %v539
  %v633 = vpack.c.b16 %v630, %v629
  %v634 = vpack.c.b16 %v632, %v631
  %637 = vmatprep.subr.bf16.mxu0 0
  %638 = vmatpush1.bf16.msra.mxu0 0
  %639 = vmatprep.subr.bf16.mxu0 0
  %640 = vmatpush1.bf16.msra.mxu0 0
  %641 = vmatprep.subr.bf16.mxu0 0
  %642 = vmatpush1.bf16.msra.mxu0 0
  %643 = vmatprep.subr.bf16.mxu0 0
  %644 = vmatpush1.bf16.msra.mxu0 0
  %645 = vmatprep.subr.bf16.mxu0 0
  %646 = vmatpush1.bf16.msra.mxu0 0
  %647 = vmatprep.subr.bf16.mxu0 0
  %648 = vmatpush1.bf16.msra.mxu0 0
  %649 = vmatprep.subr.bf16.mxu0 0
  %650 = vmatpush1.bf16.msra.mxu0 %v634
  %651 = vmatprep.subr.bf16.mxu0 0
  %652 = vmatpush1.bf16.msra.mxu0 %v633
  %653 = vmatprep.subr.bf16.mxu0 0
  %654 = vmatpush2.bf16.msra.mxu0 0
  %655 = vmatprep.subr.bf16.mxu0 0
  %656 = vmatpush2.bf16.msra.mxu0 0
  %657 = vmatprep.subr.bf16.mxu0 0
  %658 = vmatpush2.bf16.msra.mxu0 0
  %659 = vmatprep.subr.bf16.mxu0 0
  %660 = vmatpush2.bf16.msra.mxu0 0
  %661 = vmatprep.subr.bf16.mxu0 0
  %662 = vmatpush2.bf16.msra.mxu0 0
  %663 = vmatprep.subr.bf16.mxu0 0
  %664 = vmatpush2.bf16.msra.mxu0 0
  %665 = vmatprep.subr.bf16.mxu0 0
  %666 = vmatpush2.bf16.msra.mxu0 0
  %667 = vmatprep.subr.bf16.mxu0 0
  %668 = vmatpush2.bf16.msra.mxu0 0
  %669 = vmatprep.mubr.bf16.mxu0 0
  %670 = vmatmul.mubr.bf16.gmra.mxu0 %v562
  %v671 = vpop.f32.mrf.mxu0
  %v672 = vadd.f32 0.0, %v671
  %v673 = vpop.f32.mrf.mxu0
  %v674 = vpop.f32.mrf.mxu0
  %v675 = vpop.f32.mrf.mxu0
  %676 = vdwg.mxu0
  %v677 = vadd.f32 %v547, %v672
  %v678 = vtanh.pop %v677
  %v679 = vmul.f32 %v678, %v530
  %v680 = vadd.f32 %v679, %v531
  %v681 = vmul.f32 %v680, 0.0
  %683 = vrot.lane.b32.xlu0 %v680, 64
  %v684 = vpop.permute.xlu0 %683
  %v686 = vmul.f32 %v680, %v684
  %688 = vrot.lane.b32.xlu0 %v686, 32
  %v689 = vpop.permute.xlu0 %688
  %v691 = vadd.f32 %v681, %v689
  %v692 = vtanh.pop %v691
  %694 = vrot.lane.b32.xlu0 %v692, 64
  %v695 = vpop.permute.xlu0 %694
  %v697 = vmul.f32 %v680, %v695
  %s698 = smul.u32 1, 2
  %s699 = smul.addr %s698, 8
  %s700 = scalar_lea.vmem [#allocation2], %s699
  %v701 = vld [vmem:[%s700] sm:$0xff]
  %s702 = smul.u32 6, 2
  %s703 = smul.addr %s702, 8
  %s704 = scalar_lea.vmem [#allocation2], %s703
  %v705 = vld [vmem:[%s704 + $0x8] sm:$0xff]
  %v706 = vpack.c.bf16 %v624, %v624
  %708 = vrot.lane.b32.xlu0 %v706, 32
  %v709 = vpop.permute.xlu0 %708
  %v711 = vsel %vm560, %v709, 0
  %713 = vmatprep.subr.bf16.mxu0 0
  %714 = vmatpush1.bf16.msra.mxu0 0
  %715 = vmatprep.subr.bf16.mxu0 0
  %716 = vmatpush1.bf16.msra.mxu0 0
  %717 = vmatprep.subr.bf16.mxu0 0
  %718 = vmatpush1.bf16.msra.mxu0 0
  %719 = vmatprep.subr.bf16.mxu0 0
  %720 = vmatpush1.bf16.msra.mxu0 0
  %721 = vmatprep.subr.bf16.mxu0 0
  %722 = vmatpush1.bf16.msra.mxu0 0
  %723 = vmatprep.subr.bf16.mxu0 0
  %724 = vmatpush1.bf16.msra.mxu0 0
  %725 = vmatprep.subr.bf16.mxu0 0
  %726 = vmatpush1.bf16.msra.mxu0 %v557
  %727 = vmatprep.subr.bf16.mxu0 0
  %728 = vmatpush1.bf16.msra.mxu0 %v556
  %729 = vmatprep.subr.bf16.mxu0 0
  %730 = vmatpush2.bf16.msra.mxu0 0
  %731 = vmatprep.subr.bf16.mxu0 0
  %732 = vmatpush2.bf16.msra.mxu0 0
  %733 = vmatprep.subr.bf16.mxu0 0
  %734 = vmatpush2.bf16.msra.mxu0 0
  %735 = vmatprep.subr.bf16.mxu0 0
  %736 = vmatpush2.bf16.msra.mxu0 0
  %737 = vmatprep.subr.bf16.mxu0 0
  %738 = vmatpush2.bf16.msra.mxu0 0
  %739 = vmatprep.subr.bf16.mxu0 0
  %740 = vmatpush2.bf16.msra.mxu0 0
  %741 = vmatprep.subr.bf16.mxu0 0
  %742 = vmatpush2.bf16.msra.mxu0 0
  %743 = vmatprep.subr.bf16.mxu0 0
  %744 = vmatpush2.bf16.msra.mxu0 0
  %745 = vmatprep.mubr.bf16.mxu0 0
  %746 = vmatmul.mubr.bf16.gmra.mxu0 %v711
  %v747 = vpop.f32.mrf.mxu0
  %v748 = vadd.f32 0.0, %v747
  %v749 = vpop.f32.mrf.mxu0
  %v750 = vpop.f32.mrf.mxu0
  %v751 = vpop.f32.mrf.mxu0
  %752 = vdwg.mxu0
  %v753 = vadd.f32 %v701, %v748
  %v754 = vtanh.pop %v753
  %v755 = vmul.f32 %v754, %v530
  %v756 = vadd.f32 %v755, %v531
  %v757 = vmul.f32 %v756, %v618
  %759 = vrot.lane.b32.xlu0 %v756, 64
  %v760 = vpop.permute.xlu0 %759
  %v762 = vmul.f32 %v756, %v760
  %764 = vrot.lane.b32.xlu0 %v762, 32
  %v765 = vpop.permute.xlu0 %764
  %v767 = vadd.f32 %v757, %v765
  %v768 = vtanh.pop %v767
  %770 = vrot.lane.b32.xlu0 %v768, 64
  %v771 = vpop.permute.xlu0 %770
  %v773 = vmul.f32 %v756, %v771
  %v774 = vpack.c.bf16 %v697, %v697
  %776 = vrot.lane.b32.xlu0 %v774, 32
  %v777 = vpop.permute.xlu0 %776
  %v779 = vsel %vm560, %v777, 0
  %781 = vmatprep.subr.bf16.mxu0 0
  %782 = vmatpush1.bf16.msra.mxu0 0
  %783 = vmatprep.subr.bf16.mxu0 0
  %784 = vmatpush1.bf16.msra.mxu0 0
  %785 = vmatprep.subr.bf16.mxu0 0
  %786 = vmatpush1.bf16.msra.mxu0 0
  %787 = vmatprep.subr.bf16.mxu0 0
  %788 = vmatpush1.bf16.msra.mxu0 0
  %789 = vmatprep.subr.bf16.mxu0 0
  %790 = vmatpush1.bf16.msra.mxu0 0
  %791 = vmatprep.subr.bf16.mxu0 0
  %792 = vmatpush1.bf16.msra.mxu0 0
  %793 = vmatprep.subr.bf16.mxu0 0
  %794 = vmatpush1.bf16.msra.mxu0 %v634
  %795 = vmatprep.subr.bf16.mxu0 0
  %796 = vmatpush1.bf16.msra.mxu0 %v633
  %797 = vmatprep.subr.bf16.mxu0 0
  %798 = vmatpush2.bf16.msra.mxu0 0
  %799 = vmatprep.subr.bf16.mxu0 0
  %800 = vmatpush2.bf16.msra.mxu0 0
  %801 = vmatprep.subr.bf16.mxu0 0
  %802 = vmatpush2.bf16.msra.mxu0 0
  %803 = vmatprep.subr.bf16.mxu0 0
  %804 = vmatpush2.bf16.msra.mxu0 0
  %805 = vmatprep.subr.bf16.mxu0 0
  %806 = vmatpush2.bf16.msra.mxu0 0
  %807 = vmatprep.subr.bf16.mxu0 0
  %808 = vmatpush2.bf16.msra.mxu0 0
  %809 = vmatprep.subr.bf16.mxu0 0
  %810 = vmatpush2.bf16.msra.mxu0 0
  %811 = vmatprep.subr.bf16.mxu0 0
  %812 = vmatpush2.bf16.msra.mxu0 0
  %813 = vmatprep.mubr.bf16.mxu0 0
  %814 = vmatmul.mubr.bf16.gmra.mxu0 %v779
  %v815 = vpop.f32.mrf.mxu0
  %v816 = vadd.f32 0.0, %v815
  %v817 = vpop.f32.mrf.mxu0
  %v818 = vpop.f32.mrf.mxu0
  %v819 = vpop.f32.mrf.mxu0
  %820 = vdwg.mxu0
  %v821 = vadd.f32 %v705, %v816
  %v822 = vtanh.pop %v821
  %v823 = vmul.f32 %v822, %v530
  %v824 = vadd.f32 %v823, %v531
  %v825 = vmul.f32 %v824, %v691
  %827 = vrot.lane.b32.xlu0 %v824, 64
  %v828 = vpop.permute.xlu0 %827
  %v830 = vmul.f32 %v824, %v828
  %832 = vrot.lane.b32.xlu0 %v830, 32
  %v833 = vpop.permute.xlu0 %832
  %v835 = vadd.f32 %v825, %v833
  %v836 = vtanh.pop %v835
  %838 = vrot.lane.b32.xlu0 %v836, 64
  %v839 = vpop.permute.xlu0 %838
  %v841 = vmul.f32 %v824, %v839
  %s842 = smul.u32 2, 2
  %s843 = smul.addr %s842, 8
  %s844 = scalar_lea.vmem [#allocation2], %s843
  %v845 = vld [vmem:[%s844] sm:$0xff]
  %s846 = smul.u32 5, 2
  %s847 = smul.addr %s846, 8
  %s848 = scalar_lea.vmem [#allocation2], %s847
  %v849 = vld [vmem:[%s848 + $0x8] sm:$0xff]
  %v850 = vpack.c.bf16 %v773, %v773
  %852 = vrot.lane.b32.xlu0 %v850, 32
  %v853 = vpop.permute.xlu0 %852
  %v855 = vsel %vm560, %v853, 0
  %857 = vmatprep.subr.bf16.mxu0 0
  %858 = vmatpush1.bf16.msra.mxu0 0
  %859 = vmatprep.subr.bf16.mxu0 0
  %860 = vmatpush1.bf16.msra.mxu0 0
  %861 = vmatprep.subr.bf16.mxu0 0
  %862 = vmatpush1.bf16.msra.mxu0 0
  %863 = vmatprep.subr.bf16.mxu0 0
  %864 = vmatpush1.bf16.msra.mxu0 0
  %865 = vmatprep.subr.bf16.mxu0 0
  %866 = vmatpush1.bf16.msra.mxu0 0
  %867 = vmatprep.subr.bf16.mxu0 0
  %868 = vmatpush1.bf16.msra.mxu0 0
  %869 = vmatprep.subr.bf16.mxu0 0
  %870 = vmatpush1.bf16.msra.mxu0 %v557
  %871 = vmatprep.subr.bf16.mxu0 0
  %872 = vmatpush1.bf16.msra.mxu0 %v556
  %873 = vmatprep.subr.bf16.mxu0 0
  %874 = vmatpush2.bf16.msra.mxu0 0
  %875 = vmatprep.subr.bf16.mxu0 0
  %876 = vmatpush2.bf16.msra.mxu0 0
  %877 = vmatprep.subr.bf16.mxu0 0
  %878 = vmatpush2.bf16.msra.mxu0 0
  %879 = vmatprep.subr.bf16.mxu0 0
  %880 = vmatpush2.bf16.msra.mxu0 0
  %881 = vmatprep.subr.bf16.mxu0 0
  %882 = vmatpush2.bf16.msra.mxu0 0
  %883 = vmatprep.subr.bf16.mxu0 0
  %884 = vmatpush2.bf16.msra.mxu0 0
  %885 = vmatprep.subr.bf16.mxu0 0
  %886 = vmatpush2.bf16.msra.mxu0 0
  %887 = vmatprep.subr.bf16.mxu0 0
  %888 = vmatpush2.bf16.msra.mxu0 0
  %889 = vmatprep.mubr.bf16.mxu0 0
  %890 = vmatmul.mubr.bf16.gmra.mxu0 %v855
  %v891 = vpop.f32.mrf.mxu0
  %v892 = vadd.f32 0.0, %v891
  %v893 = vpop.f32.mrf.mxu0
  %v894 = vpop.f32.mrf.mxu0
  %v895 = vpop.f32.mrf.mxu0
  %896 = vdwg.mxu0
  %v897 = vadd.f32 %v845, %v892
  %v898 = vtanh.pop %v897
  %v899 = vmul.f32 %v898, %v530
  %v900 = vadd.f32 %v899, %v531
  %v901 = vmul.f32 %v900, %v767
  %903 = vrot.lane.b32.xlu0 %v900, 64
  %v904 = vpop.permute.xlu0 %903
  %v906 = vmul.f32 %v900, %v904
  %908 = vrot.lane.b32.xlu0 %v906, 32
  %v909 = vpop.permute.xlu0 %908
  %v911 = vadd.f32 %v901, %v909
  %v912 = vtanh.pop %v911
  %914 = vrot.lane.b32.xlu0 %v912, 64
  %v915 = vpop.permute.xlu0 %914
  %v917 = vmul.f32 %v900, %v915
  %v918 = vpack.c.bf16 %v841, %v841
  %920 = vrot.lane.b32.xlu0 %v918, 32
  %v921 = vpop.permute.xlu0 %920
  %v923 = vsel %vm560, %v921, 0
  %925 = vmatprep.subr.bf16.mxu0 0
  %926 = vmatpush1.bf16.msra.mxu0 0
  %927 = vmatprep.subr.bf16.mxu0 0
  %928 = vmatpush1.bf16.msra.mxu0 0
  %929 = vmatprep.subr.bf16.mxu0 0
  %930 = vmatpush1.bf16.msra.mxu0 0
  %931 = vmatprep.subr.bf16.mxu0 0
  %932 = vmatpush1.bf16.msra.mxu0 0
  %933 = vmatprep.subr.bf16.mxu0 0
  %934 = vmatpush1.bf16.msra.mxu0 0
  %935 = vmatprep.subr.bf16.mxu0 0
  %936 = vmatpush1.bf16.msra.mxu0 0
  %937 = vmatprep.subr.bf16.mxu0 0
  %938 = vmatpush1.bf16.msra.mxu0 %v634
  %939 = vmatprep.subr.bf16.mxu0 0
  %940 = vmatpush1.bf16.msra.mxu0 %v633
  %941 = vmatprep.subr.bf16.mxu0 0
  %942 = vmatpush2.bf16.msra.mxu0 0
  %943 = vmatprep.subr.bf16.mxu0 0
  %944 = vmatpush2.bf16.msra.mxu0 0
  %945 = vmatprep.subr.bf16.mxu0 0
  %946 = vmatpush2.bf16.msra.mxu0 0
  %947 = vmatprep.subr.bf16.mxu0 0
  %948 = vmatpush2.bf16.msra.mxu0 0
  %949 = vmatprep.subr.bf16.mxu0 0
  %950 = vmatpush2.bf16.msra.mxu0 0
  %951 = vmatprep.subr.bf16.mxu0 0
  %952 = vmatpush2.bf16.msra.mxu0 0
  %953 = vmatprep.subr.bf16.mxu0 0
  %954 = vmatpush2.bf16.msra.mxu0 0
  %955 = vmatprep.subr.bf16.mxu0 0
  %956 = vmatpush2.bf16.msra.mxu0 0
  %957 = vmatprep.mubr.bf16.mxu0 0
  %958 = vmatmul.mubr.bf16.gmra.mxu0 %v923
  %v959 = vpop.f32.mrf.mxu0
  %v960 = vadd.f32 0.0, %v959
  %v961 = vpop.f32.mrf.mxu0
  %v962 = vpop.f32.mrf.mxu0
  %v963 = vpop.f32.mrf.mxu0
  %964 = vdwg.mxu0
  %v965 = vadd.f32 %v849, %v960
  %v966 = vtanh.pop %v965
  %v967 = vmul.f32 %v966, %v530
  %v968 = vadd.f32 %v967, %v531
  %v969 = vmul.f32 %v968, %v835
  %971 = vrot.lane.b32.xlu0 %v968, 64
  %v972 = vpop.permute.xlu0 %971
  %v974 = vmul.f32 %v968, %v972
  %976 = vrot.lane.b32.xlu0 %v974, 32
  %v977 = vpop.permute.xlu0 %976
  %v979 = vadd.f32 %v969, %v977
  %v980 = vtanh.pop %v979
  %982 = vrot.lane.b32.xlu0 %v980, 64
  %v983 = vpop.permute.xlu0 %982
  %v985 = vmul.f32 %v968, %v983
  %s986 = smul.u32 3, 2
  %s987 = smul.addr %s986, 8
  %s988 = scalar_lea.vmem [#allocation2], %s987
  %v989 = vld [vmem:[%s988] sm:$0xff]
  %s990 = smul.u32 4, 2
  %s991 = smul.addr %s990, 8
  %s992 = scalar_lea.vmem [#allocation2], %s991
  %v993 = vld [vmem:[%s992 + $0x8] sm:$0xff]
  %v994 = vpack.c.bf16 %v917, %v917
  %996 = vrot.lane.b32.xlu0 %v994, 32
  %v997 = vpop.permute.xlu0 %996
  %v999 = vsel %vm560, %v997, 0
  %1001 = vmatprep.subr.bf16.mxu0 0
  %1002 = vmatpush1.bf16.msra.mxu0 0
  %1003 = vmatprep.subr.bf16.mxu0 0
  %1004 = vmatpush1.bf16.msra.mxu0 0
  %1005 = vmatprep.subr.bf16.mxu0 0
  %1006 = vmatpush1.bf16.msra.mxu0 0
  %1007 = vmatprep.subr.bf16.mxu0 0
  %1008 = vmatpush1.bf16.msra.mxu0 0
  %1009 = vmatprep.subr.bf16.mxu0 0
  %1010 = vmatpush1.bf16.msra.mxu0 0
  %1011 = vmatprep.subr.bf16.mxu0 0
  %1012 = vmatpush1.bf16.msra.mxu0 0
  %1013 = vmatprep.subr.bf16.mxu0 0
  %1014 = vmatpush1.bf16.msra.mxu0 %v557
  %1015 = vmatprep.subr.bf16.mxu0 0
  %1016 = vmatpush1.bf16.msra.mxu0 %v556
  %1017 = vmatprep.subr.bf16.mxu0 0
  %1018 = vmatpush2.bf16.msra.mxu0 0
  %1019 = vmatprep.subr.bf16.mxu0 0
  %1020 = vmatpush2.bf16.msra.mxu0 0
  %1021 = vmatprep.subr.bf16.mxu0 0
  %1022 = vmatpush2.bf16.msra.mxu0 0
  %1023 = vmatprep.subr.bf16.mxu0 0
  %1024 = vmatpush2.bf16.msra.mxu0 0
  %1025 = vmatprep.subr.bf16.mxu0 0
  %1026 = vmatpush2.bf16.msra.mxu0 0
  %1027 = vmatprep.subr.bf16.mxu0 0
  %1028 = vmatpush2.bf16.msra.mxu0 0
  %1029 = vmatprep.subr.bf16.mxu0 0
  %1030 = vmatpush2.bf16.msra.mxu0 0
  %1031 = vmatprep.subr.bf16.mxu0 0
  %1032 = vmatpush2.bf16.msra.mxu0 0
  %1033 = vmatprep.mubr.bf16.mxu0 0
  %1034 = vmatmul.mubr.bf16.gmra.mxu0 %v999
  %v1035 = vpop.f32.mrf.mxu0
  %v1036 = vadd.f32 0.0, %v1035
  %v1037 = vpop.f32.mrf.mxu0
  %v1038 = vpop.f32.mrf.mxu0
  %v1039 = vpop.f32.mrf.mxu0
  %1040 = vdwg.mxu0
  %v1041 = vadd.f32 %v989, %v1036
  %v1042 = vtanh.pop %v1041
  %v1043 = vmul.f32 %v1042, %v530
  %v1044 = vadd.f32 %v1043, %v531
  %v1045 = vmul.f32 %v1044, %v911
  %1047 = vrot.lane.b32.xlu0 %v1044, 64
  %v1048 = vpop.permute.xlu0 %1047
  %v1050 = vmul.f32 %v1044, %v1048
  %1052 = vrot.lane.b32.xlu0 %v1050, 32
  %v1053 = vpop.permute.xlu0 %1052
  %v1055 = vadd.f32 %v1045, %v1053
  %v1056 = vtanh.pop %v1055
  %1058 = vrot.lane.b32.xlu0 %v1056, 64
  %v1059 = vpop.permute.xlu0 %1058
  %v1061 = vmul.f32 %v1044, %v1059
  %v1062 = vpack.c.bf16 %v985, %v985
  %1064 = vrot.lane.b32.xlu0 %v1062, 32
  %v1065 = vpop.permute.xlu0 %1064
  %v1067 = vsel %vm560, %v1065, 0
  %1069 = vmatprep.subr.bf16.mxu0 0
  %1070 = vmatpush1.bf16.msra.mxu0 0
  %1071 = vmatprep.subr.bf16.mxu0 0
  %1072 = vmatpush1.bf16.msra.mxu0 0
  %1073 = vmatprep.subr.bf16.mxu0 0
  %1074 = vmatpush1.bf16.msra.mxu0 0
  %1075 = vmatprep.subr.bf16.mxu0 0
  %1076 = vmatpush1.bf16.msra.mxu0 0
  %1077 = vmatprep.subr.bf16.mxu0 0
  %1078 = vmatpush1.bf16.msra.mxu0 0
  %1079 = vmatprep.subr.bf16.mxu0 0
  %1080 = vmatpush1.bf16.msra.mxu0 0
  %1081 = vmatprep.subr.bf16.mxu0 0
  %1082 = vmatpush1.bf16.msra.mxu0 %v634
  %1083 = vmatprep.subr.bf16.mxu0 0
  %1084 = vmatpush1.bf16.msra.mxu0 %v633
  %1085 = vmatprep.subr.bf16.mxu0 0
  %1086 = vmatpush2.bf16.msra.mxu0 0
  %1087 = vmatprep.subr.bf16.mxu0 0
  %1088 = vmatpush2.bf16.msra.mxu0 0
  %1089 = vmatprep.subr.bf16.mxu0 0
  %1090 = vmatpush2.bf16.msra.mxu0 0
  %1091 = vmatprep.subr.bf16.mxu0 0
  %1092 = vmatpush2.bf16.msra.mxu0 0
  %1093 = vmatprep.subr.bf16.mxu0 0
  %1094 = vmatpush2.bf16.msra.mxu0 0
  %1095 = vmatprep.subr.bf16.mxu0 0
  %1096 = vmatpush2.bf16.msra.mxu0 0
  %1097 = vmatprep.subr.bf16.mxu0 0
  %1098 = vmatpush2.bf16.msra.mxu0 0
  %1099 = vmatprep.subr.bf16.mxu0 0
  %1100 = vmatpush2.bf16.msra.mxu0 0
  %1101 = vmatprep.mubr.bf16.mxu0 0
  %1102 = vmatmul.mubr.bf16.gmra.mxu0 %v1067
  %v1103 = vpop.f32.mrf.mxu0
  %v1104 = vadd.f32 0.0, %v1103
  %v1105 = vpop.f32.mrf.mxu0
  %v1106 = vpop.f32.mrf.mxu0
  %v1107 = vpop.f32.mrf.mxu0
  %1108 = vdwg.mxu0
  %v1109 = vadd.f32 %v993, %v1104
  %v1110 = vtanh.pop %v1109
  %v1111 = vmul.f32 %v1110, %v530
  %v1112 = vadd.f32 %v1111, %v531
  %v1113 = vmul.f32 %v1112, %v979
  %1115 = vrot.lane.b32.xlu0 %v1112, 64
  %v1116 = vpop.permute.xlu0 %1115
  %v1118 = vmul.f32 %v1112, %v1116
  %1120 = vrot.lane.b32.xlu0 %v1118, 32
  %v1121 = vpop.permute.xlu0 %1120
  %v1123 = vadd.f32 %v1113, %v1121
  %v1124 = vtanh.pop %v1123
  %1126 = vrot.lane.b32.xlu0 %v1124, 64
  %v1127 = vpop.permute.xlu0 %1126
  %v1129 = vmul.f32 %v1112, %v1127
  %v1130 = vld [vmem:[%s992] sm:$0xff]
  %v1131 = vld [vmem:[%s988 + $0x8] sm:$0xff]
  %v1132 = vpack.c.bf16 %v1061, %v1061
  %1134 = vrot.lane.b32.xlu0 %v1132, 32
  %v1135 = vpop.permute.xlu0 %1134
  %v1137 = vsel %vm560, %v1135, 0
  %1139 = vmatprep.subr.bf16.mxu0 0
  %1140 = vmatpush1.bf16.msra.mxu0 0
  %1141 = vmatprep.subr.bf16.mxu0 0
  %1142 = vmatpush1.bf16.msra.mxu0 0
  %1143 = vmatprep.subr.bf16.mxu0 0
  %1144 = vmatpush1.bf16.msra.mxu0 0
  %1145 = vmatprep.subr.bf16.mxu0 0
  %1146 = vmatpush1.bf16.msra.mxu0 0
  %1147 = vmatprep.subr.bf16.mxu0 0
  %1148 = vmatpush1.bf16.msra.mxu0 0
  %1149 = vmatprep.subr.bf16.mxu0 0
  %1150 = vmatpush1.bf16.msra.mxu0 0
  %1151 = vmatprep.subr.bf16.mxu0 0
  %1152 = vmatpush1.bf16.msra.mxu0 %v557
  %1153 = vmatprep.subr.bf16.mxu0 0
  %1154 = vmatpush1.bf16.msra.mxu0 %v556
  %1155 = vmatprep.subr.bf16.mxu0 0
  %1156 = vmatpush2.bf16.msra.mxu0 0
  %1157 = vmatprep.subr.bf16.mxu0 0
  %1158 = vmatpush2.bf16.msra.mxu0 0
  %1159 = vmatprep.subr.bf16.mxu0 0
  %1160 = vmatpush2.bf16.msra.mxu0 0
  %1161 = vmatprep.subr.bf16.mxu0 0
  %1162 = vmatpush2.bf16.msra.mxu0 0
  %1163 = vmatprep.subr.bf16.mxu0 0
  %1164 = vmatpush2.bf16.msra.mxu0 0
  %1165 = vmatprep.subr.bf16.mxu0 0
  %1166 = vmatpush2.bf16.msra.mxu0 0
  %1167 = vmatprep.subr.bf16.mxu0 0
  %1168 = vmatpush2.bf16.msra.mxu0 0
  %1169 = vmatprep.subr.bf16.mxu0 0
  %1170 = vmatpush2.bf16.msra.mxu0 0
  %1171 = vmatprep.mubr.bf16.mxu0 0
  %1172 = vmatmul.mubr.bf16.gmra.mxu0 %v1137
  %v1173 = vpop.f32.mrf.mxu0
  %v1174 = vadd.f32 0.0, %v1173
  %v1175 = vpop.f32.mrf.mxu0
  %v1176 = vpop.f32.mrf.mxu0
  %v1177 = vpop.f32.mrf.mxu0
  %1178 = vdwg.mxu0
  %v1179 = vadd.f32 %v1130, %v1174
  %v1180 = vtanh.pop %v1179
  %v1181 = vmul.f32 %v1180, %v530
  %v1182 = vadd.f32 %v1181, %v531
  %v1183 = vmul.f32 %v1182, %v1055
  %1185 = vrot.lane.b32.xlu0 %v1182, 64
  %v1186 = vpop.permute.xlu0 %1185
  %v1188 = vmul.f32 %v1182, %v1186
  %1190 = vrot.lane.b32.xlu0 %v1188, 32
  %v1191 = vpop.permute.xlu0 %1190
  %v1193 = vadd.f32 %v1183, %v1191
  %v1194 = vtanh.pop %v1193
  %1196 = vrot.lane.b32.xlu0 %v1194, 64
  %v1197 = vpop.permute.xlu0 %1196
  %v1199 = vmul.f32 %v1182, %v1197
  %v1200 = vpack.c.bf16 %v1129, %v1129
  %1202 = vrot.lane.b32.xlu0 %v1200, 32
  %v1203 = vpop.permute.xlu0 %1202
  %v1205 = vsel %vm560, %v1203, 0
  %1207 = vmatprep.subr.bf16.mxu0 0
  %1208 = vmatpush1.bf16.msra.mxu0 0
  %1209 = vmatprep.subr.bf16.mxu0 0
  %1210 = vmatpush1.bf16.msra.mxu0 0
  %1211 = vmatprep.subr.bf16.mxu0 0
  %1212 = vmatpush1.bf16.msra.mxu0 0
  %1213 = vmatprep.subr.bf16.mxu0 0
  %1214 = vmatpush1.bf16.msra.mxu0 0
  %1215 = vmatprep.subr.bf16.mxu0 0
  %1216 = vmatpush1.bf16.msra.mxu0 0
  %1217 = vmatprep.subr.bf16.mxu0 0
  %1218 = vmatpush1.bf16.msra.mxu0 0
  %1219 = vmatprep.subr.bf16.mxu0 0
  %1220 = vmatpush1.bf16.msra.mxu0 %v634
  %1221 = vmatprep.subr.bf16.mxu0 0
  %1222 = vmatpush1.bf16.msra.mxu0 %v633
  %1223 = vmatprep.subr.bf16.mxu0 0
  %1224 = vmatpush2.bf16.msra.mxu0 0
  %1225 = vmatprep.subr.bf16.mxu0 0
  %1226 = vmatpush2.bf16.msra.mxu0 0
  %1227 = vmatprep.subr.bf16.mxu0 0
  %1228 = vmatpush2.bf16.msra.mxu0 0
  %1229 = vmatprep.subr.bf16.mxu0 0
  %1230 = vmatpush2.bf16.msra.mxu0 0
  %1231 = vmatprep.subr.bf16.mxu0 0
  %1232 = vmatpush2.bf16.msra.mxu0 0
  %1233 = vmatprep.subr.bf16.mxu0 0
  %1234 = vmatpush2.bf16.msra.mxu0 0
  %1235 = vmatprep.subr.bf16.mxu0 0
  %1236 = vmatpush2.bf16.msra.mxu0 0
  %1237 = vmatprep.subr.bf16.mxu0 0
  %1238 = vmatpush2.bf16.msra.mxu0 0
  %1239 = vmatprep.mubr.bf16.mxu0 0
  %1240 = vmatmul.mubr.bf16.gmra.mxu0 %v1205
  %v1241 = vpop.f32.mrf.mxu0
  %v1242 = vadd.f32 0.0, %v1241
  %v1243 = vpop.f32.mrf.mxu0
  %v1244 = vpop.f32.mrf.mxu0
  %v1245 = vpop.f32.mrf.mxu0
  %1246 = vdwg.mxu0
  %v1247 = vadd.f32 %v1131, %v1242
  %v1248 = vtanh.pop %v1247
  %v1249 = vmul.f32 %v1248, %v530
  %v1250 = vadd.f32 %v1249, %v531
  %v1251 = vmul.f32 %v1250, %v1123
  %1253 = vrot.lane.b32.xlu0 %v1250, 64
  %v1254 = vpop.permute.xlu0 %1253
  %v1256 = vmul.f32 %v1250, %v1254
  %1258 = vrot.lane.b32.xlu0 %v1256, 32
  %v1259 = vpop.permute.xlu0 %1258
  %v1261 = vadd.f32 %v1251, %v1259
  %v1262 = vtanh.pop %v1261
  %1264 = vrot.lane.b32.xlu0 %v1262, 64
  %v1265 = vpop.permute.xlu0 %1264
  %v1267 = vmul.f32 %v1250, %v1265
  %v1268 = vld [vmem:[%s848] sm:$0xff]
  %v1269 = vld [vmem:[%s844 + $0x8] sm:$0xff]
  %v1270 = vpack.c.bf16 %v1199, %v1199
  %1272 = vrot.lane.b32.xlu0 %v1270, 32
  %v1273 = vpop.permute.xlu0 %1272
  %v1275 = vsel %vm560, %v1273, 0
  %1277 = vmatprep.subr.bf16.mxu0 0
  %1278 = vmatpush1.bf16.msra.mxu0 0
  %1279 = vmatprep.subr.bf16.mxu0 0
  %1280 = vmatpush1.bf16.msra.mxu0 0
  %1281 = vmatprep.subr.bf16.mxu0 0
  %1282 = vmatpush1.bf16.msra.mxu0 0
  %1283 = vmatprep.subr.bf16.mxu0 0
  %1284 = vmatpush1.bf16.msra.mxu0 0
  %1285 = vmatprep.subr.bf16.mxu0 0
  %1286 = vmatpush1.bf16.msra.mxu0 0
  %1287 = vmatprep.subr.bf16.mxu0 0
  %1288 = vmatpush1.bf16.msra.mxu0 0
  %1289 = vmatprep.subr.bf16.mxu0 0
  %1290 = vmatpush1.bf16.msra.mxu0 %v557
  %1291 = vmatprep.subr.bf16.mxu0 0
  %1292 = vmatpush1.bf16.msra.mxu0 %v556
  %1293 = vmatprep.subr.bf16.mxu0 0
  %1294 = vmatpush2.bf16.msra.mxu0 0
  %1295 = vmatprep.subr.bf16.mxu0 0
  %1296 = vmatpush2.bf16.msra.mxu0 0
  %1297 = vmatprep.subr.bf16.mxu0 0
  %1298 = vmatpush2.bf16.msra.mxu0 0
  %1299 = vmatprep.subr.bf16.mxu0 0
  %1300 = vmatpush2.bf16.msra.mxu0 0
  %1301 = vmatprep.subr.bf16.mxu0 0
  %1302 = vmatpush2.bf16.msra.mxu0 0
  %1303 = vmatprep.subr.bf16.mxu0 0
  %1304 = vmatpush2.bf16.msra.mxu0 0
  %1305 = vmatprep.subr.bf16.mxu0 0
  %1306 = vmatpush2.bf16.msra.mxu0 0
  %1307 = vmatprep.subr.bf16.mxu0 0
  %1308 = vmatpush2.bf16.msra.mxu0 0
  %1309 = vmatprep.mubr.bf16.mxu0 0
  %1310 = vmatmul.mubr.bf16.gmra.mxu0 %v1275
  %v1311 = vpop.f32.mrf.mxu0
  %v1312 = vadd.f32 0.0, %v1311
  %v1313 = vpop.f32.mrf.mxu0
  %v1314 = vpop.f32.mrf.mxu0
  %v1315 = vpop.f32.mrf.mxu0
  %1316 = vdwg.mxu0
  %v1317 = vadd.f32 %v1268, %v1312
  %v1318 = vtanh.pop %v1317
  %v1319 = vmul.f32 %v1318, %v530
  %v1320 = vadd.f32 %v1319, %v531
  %v1321 = vmul.f32 %v1320, %v1193
  %1323 = vrot.lane.b32.xlu0 %v1320, 64
  %v1324 = vpop.permute.xlu0 %1323
  %v1326 = vmul.f32 %v1320, %v1324
  %1328 = vrot.lane.b32.xlu0 %v1326, 32
  %v1329 = vpop.permute.xlu0 %1328
  %v1331 = vadd.f32 %v1321, %v1329
  %v1332 = vtanh.pop %v1331
  %1334 = vrot.lane.b32.xlu0 %v1332, 64
  %v1335 = vpop.permute.xlu0 %1334
  %v1337 = vmul.f32 %v1320, %v1335
  %v1338 = vpack.c.bf16 %v1267, %v1267
  %1340 = vrot.lane.b32.xlu0 %v1338, 32
  %v1341 = vpop.permute.xlu0 %1340
  %v1343 = vsel %vm560, %v1341, 0
  %1345 = vmatprep.subr.bf16.mxu0 0
  %1346 = vmatpush1.bf16.msra.mxu0 0
  %1347 = vmatprep.subr.bf16.mxu0 0
  %1348 = vmatpush1.bf16.msra.mxu0 0
  %1349 = vmatprep.subr.bf16.mxu0 0
  %1350 = vmatpush1.bf16.msra.mxu0 0
  %1351 = vmatprep.subr.bf16.mxu0 0
  %1352 = vmatpush1.bf16.msra.mxu0 0
  %1353 = vmatprep.subr.bf16.mxu0 0
  %1354 = vmatpush1.bf16.msra.mxu0 0
  %1355 = vmatprep.subr.bf16.mxu0 0
  %1356 = vmatpush1.bf16.msra.mxu0 0
  %1357 = vmatprep.subr.bf16.mxu0 0
  %1358 = vmatpush1.bf16.msra.mxu0 %v634
  %1359 = vmatprep.subr.bf16.mxu0 0
  %1360 = vmatpush1.bf16.msra.mxu0 %v633
  %1361 = vmatprep.subr.bf16.mxu0 0
  %1362 = vmatpush2.bf16.msra.mxu0 0
  %1363 = vmatprep.subr.bf16.mxu0 0
  %1364 = vmatpush2.bf16.msra.mxu0 0
  %1365 = vmatprep.subr.bf16.mxu0 0
  %1366 = vmatpush2.bf16.msra.mxu0 0
  %1367 = vmatprep.subr.bf16.mxu0 0
  %1368 = vmatpush2.bf16.msra.mxu0 0
  %1369 = vmatprep.subr.bf16.mxu0 0
  %1370 = vmatpush2.bf16.msra.mxu0 0
  %1371 = vmatprep.subr.bf16.mxu0 0
  %1372 = vmatpush2.bf16.msra.mxu0 0
  %1373 = vmatprep.subr.bf16.mxu0 0
  %1374 = vmatpush2.bf16.msra.mxu0 0
  %1375 = vmatprep.subr.bf16.mxu0 0
  %1376 = vmatpush2.bf16.msra.mxu0 0
  %1377 = vmatprep.mubr.bf16.mxu0 0
  %1378 = vmatmul.mubr.bf16.gmra.mxu0 %v1343
  %v1379 = vpop.f32.mrf.mxu0
  %v1380 = vadd.f32 0.0, %v1379
  %v1381 = vpop.f32.mrf.mxu0
  %v1382 = vpop.f32.mrf.mxu0
  %v1383 = vpop.f32.mrf.mxu0
  %1384 = vdwg.mxu0
  %v1385 = vadd.f32 %v1269, %v1380
  %v1386 = vtanh.pop %v1385
  %v1387 = vmul.f32 %v1386, %v530
  %v1388 = vadd.f32 %v1387, %v531
  %v1389 = vmul.f32 %v1388, %v1261
  %1391 = vrot.lane.b32.xlu0 %v1388, 64
  %v1392 = vpop.permute.xlu0 %1391
  %v1394 = vmul.f32 %v1388, %v1392
  %1396 = vrot.lane.b32.xlu0 %v1394, 32
  %v1397 = vpop.permute.xlu0 %1396
  %v1399 = vadd.f32 %v1389, %v1397
  %v1400 = vtanh.pop %v1399
  %1402 = vrot.lane.b32.xlu0 %v1400, 64
  %v1403 = vpop.permute.xlu0 %1402
  %v1405 = vmul.f32 %v1388, %v1403
  %v1406 = vld [vmem:[%s704] sm:$0xff]
  %v1407 = vld [vmem:[%s700 + $0x8] sm:$0xff]
  %v1408 = vpack.c.bf16 %v1337, %v1337
  %1410 = vrot.lane.b32.xlu0 %v1408, 32
  %v1411 = vpop.permute.xlu0 %1410
  %v1413 = vsel %vm560, %v1411, 0
  %1415 = vmatprep.subr.bf16.mxu0 0
  %1416 = vmatpush1.bf16.msra.mxu0 0
  %1417 = vmatprep.subr.bf16.mxu0 0
  %1418 = vmatpush1.bf16.msra.mxu0 0
  %1419 = vmatprep.subr.bf16.mxu0 0
  %1420 = vmatpush1.bf16.msra.mxu0 0
  %1421 = vmatprep.subr.bf16.mxu0 0
  %1422 = vmatpush1.bf16.msra.mxu0 0
  %1423 = vmatprep.subr.bf16.mxu0 0
  %1424 = vmatpush1.bf16.msra.mxu0 0
  %1425 = vmatprep.subr.bf16.mxu0 0
  %1426 = vmatpush1.bf16.msra.mxu0 0
  %1427 = vmatprep.subr.bf16.mxu0 0
  %1428 = vmatpush1.bf16.msra.mxu0 %v557
  %1429 = vmatprep.subr.bf16.mxu0 0
  %1430 = vmatpush1.bf16.msra.mxu0 %v556
  %1431 = vmatprep.subr.bf16.mxu0 0
  %1432 = vmatpush2.bf16.msra.mxu0 0
  %1433 = vmatprep.subr.bf16.mxu0 0
  %1434 = vmatpush2.bf16.msra.mxu0 0
  %1435 = vmatprep.subr.bf16.mxu0 0
  %1436 = vmatpush2.bf16.msra.mxu0 0
  %1437 = vmatprep.subr.bf16.mxu0 0
  %1438 = vmatpush2.bf16.msra.mxu0 0
  %1439 = vmatprep.subr.bf16.mxu0 0
  %1440 = vmatpush2.bf16.msra.mxu0 0
  %1441 = vmatprep.subr.bf16.mxu0 0
  %1442 = vmatpush2.bf16.msra.mxu0 0
  %1443 = vmatprep.subr.bf16.mxu0 0
  %1444 = vmatpush2.bf16.msra.mxu0 0
  %1445 = vmatprep.subr.bf16.mxu0 0
  %1446 = vmatpush2.bf16.msra.mxu0 0
  %1447 = vmatprep.mubr.bf16.mxu0 0
  %1448 = vmatmul.mubr.bf16.gmra.mxu0 %v1413
  %v1449 = vpop.f32.mrf.mxu0
  %v1450 = vadd.f32 0.0, %v1449
  %v1451 = vpop.f32.mrf.mxu0
  %v1452 = vpop.f32.mrf.mxu0
  %v1453 = vpop.f32.mrf.mxu0
  %1454 = vdwg.mxu0
  %v1455 = vadd.f32 %v1406, %v1450
  %v1456 = vtanh.pop %v1455
  %v1457 = vmul.f32 %v1456, %v530
  %v1458 = vadd.f32 %v1457, %v531
  %v1459 = vmul.f32 %v1458, %v1331
  %1461 = vrot.lane.b32.xlu0 %v1458, 64
  %v1462 = vpop.permute.xlu0 %1461
  %v1464 = vmul.f32 %v1458, %v1462
  %1466 = vrot.lane.b32.xlu0 %v1464, 32
  %v1467 = vpop.permute.xlu0 %1466
  %v1469 = vadd.f32 %v1459, %v1467
  %v1470 = vtanh.pop %v1469
  %1472 = vrot.lane.b32.xlu0 %v1470, 64
  %v1473 = vpop.permute.xlu0 %1472
  %v1475 = vmul.f32 %v1458, %v1473
  %v1476 = vpack.c.bf16 %v1405, %v1405
  %1478 = vrot.lane.b32.xlu0 %v1476, 32
  %v1479 = vpop.permute.xlu0 %1478
  %v1481 = vsel %vm560, %v1479, 0
  %1483 = vmatprep.subr.bf16.mxu0 0
  %1484 = vmatpush1.bf16.msra.mxu0 0
  %1485 = vmatprep.subr.bf16.mxu0 0
  %1486 = vmatpush1.bf16.msra.mxu0 0
  %1487 = vmatprep.subr.bf16.mxu0 0
  %1488 = vmatpush1.bf16.msra.mxu0 0
  %1489 = vmatprep.subr.bf16.mxu0 0
  %1490 = vmatpush1.bf16.msra.mxu0 0
  %1491 = vmatprep.subr.bf16.mxu0 0
  %1492 = vmatpush1.bf16.msra.mxu0 0
  %1493 = vmatprep.subr.bf16.mxu0 0
  %1494 = vmatpush1.bf16.msra.mxu0 0
  %1495 = vmatprep.subr.bf16.mxu0 0
  %1496 = vmatpush1.bf16.msra.mxu0 %v634
  %1497 = vmatprep.subr.bf16.mxu0 0
  %1498 = vmatpush1.bf16.msra.mxu0 %v633
  %1499 = vmatprep.subr.bf16.mxu0 0
  %1500 = vmatpush2.bf16.msra.mxu0 0
  %1501 = vmatprep.subr.bf16.mxu0 0
  %1502 = vmatpush2.bf16.msra.mxu0 0
  %1503 = vmatprep.subr.bf16.mxu0 0
  %1504 = vmatpush2.bf16.msra.mxu0 0
  %1505 = vmatprep.subr.bf16.mxu0 0
  %1506 = vmatpush2.bf16.msra.mxu0 0
  %1507 = vmatprep.subr.bf16.mxu0 0
  %1508 = vmatpush2.bf16.msra.mxu0 0
  %1509 = vmatprep.subr.bf16.mxu0 0
  %1510 = vmatpush2.bf16.msra.mxu0 0
  %1511 = vmatprep.subr.bf16.mxu0 0
  %1512 = vmatpush2.bf16.msra.mxu0 0
  %1513 = vmatprep.subr.bf16.mxu0 0
  %1514 = vmatpush2.bf16.msra.mxu0 0
  %1515 = vmatprep.mubr.bf16.mxu0 0
  %1516 = vmatmul.mubr.bf16.gmra.mxu0 %v1481
  %v1517 = vpop.f32.mrf.mxu0
  %v1518 = vadd.f32 0.0, %v1517
  %v1519 = vpop.f32.mrf.mxu0
  %v1520 = vpop.f32.mrf.mxu0
  %v1521 = vpop.f32.mrf.mxu0
  %1522 = vdwg.mxu0
  %v1523 = vadd.f32 %v1407, %v1518
  %v1524 = vtanh.pop %v1523
  %v1525 = vmul.f32 %v1524, %v530
  %v1526 = vadd.f32 %v1525, %v531
  %v1527 = vmul.f32 %v1526, %v1399
  %1529 = vrot.lane.b32.xlu0 %v1526, 64
  %v1530 = vpop.permute.xlu0 %1529
  %v1532 = vmul.f32 %v1526, %v1530
  %1534 = vrot.lane.b32.xlu0 %v1532, 32
  %v1535 = vpop.permute.xlu0 %1534
  %v1537 = vadd.f32 %v1527, %v1535
  %v1538 = vtanh.pop %v1537
  %1540 = vrot.lane.b32.xlu0 %v1538, 64
  %v1541 = vpop.permute.xlu0 %1540
  %v1543 = vmul.f32 %v1526, %v1541
  %v1544 = vld [vmem:[%s546] sm:$0xff]
  %v1545 = vld [vmem:[%s542 + $0x8] sm:$0xff]
  %v1546 = vpack.c.bf16 %v1475, %v1475
  %1548 = vrot.lane.b32.xlu0 %v1546, 32
  %v1549 = vpop.permute.xlu0 %1548
  %v1551 = vsel %vm560, %v1549, 0
  %1553 = vmatprep.subr.bf16.mxu0 0
  %1554 = vmatpush1.bf16.msra.mxu0 0
  %1555 = vmatprep.subr.bf16.mxu0 0
  %1556 = vmatpush1.bf16.msra.mxu0 0
  %1557 = vmatprep.subr.bf16.mxu0 0
  %1558 = vmatpush1.bf16.msra.mxu0 0
  %1559 = vmatprep.subr.bf16.mxu0 0
  %1560 = vmatpush1.bf16.msra.mxu0 0
  %1561 = vmatprep.subr.bf16.mxu0 0
  %1562 = vmatpush1.bf16.msra.mxu0 0
  %1563 = vmatprep.subr.bf16.mxu0 0
  %1564 = vmatpush1.bf16.msra.mxu0 0
  %1565 = vmatprep.subr.bf16.mxu0 0
  %1566 = vmatpush1.bf16.msra.mxu0 %v557
  %1567 = vmatprep.subr.bf16.mxu0 0
  %1568 = vmatpush1.bf16.msra.mxu0 %v556
  %1569 = vmatprep.subr.bf16.mxu0 0
  %1570 = vmatpush2.bf16.msra.mxu0 0
  %1571 = vmatprep.subr.bf16.mxu0 0
  %1572 = vmatpush2.bf16.msra.mxu0 0
  %1573 = vmatprep.subr.bf16.mxu0 0
  %1574 = vmatpush2.bf16.msra.mxu0 0
  %1575 = vmatprep.subr.bf16.mxu0 0
  %1576 = vmatpush2.bf16.msra.mxu0 0
  %1577 = vmatprep.subr.bf16.mxu0 0
  %1578 = vmatpush2.bf16.msra.mxu0 0
  %1579 = vmatprep.subr.bf16.mxu0 0
  %1580 = vmatpush2.bf16.msra.mxu0 0
  %1581 = vmatprep.subr.bf16.mxu0 0
  %1582 = vmatpush2.bf16.msra.mxu0 0
  %1583 = vmatprep.subr.bf16.mxu0 0
  %1584 = vmatpush2.bf16.msra.mxu0 0
  %1585 = vmatprep.mubr.bf16.mxu0 0
  %1586 = vmatmul.mubr.bf16.gmra.mxu0 %v1551
  %v1587 = vpop.f32.mrf.mxu0
  %v1588 = vadd.f32 0.0, %v1587
  %v1589 = vpop.f32.mrf.mxu0
  %v1590 = vpop.f32.mrf.mxu0
  %v1591 = vpop.f32.mrf.mxu0
  %1592 = vdwg.mxu0
  %v1593 = vadd.f32 %v1544, %v1588
  %v1594 = vtanh.pop %v1593
  %v1595 = vmul.f32 %v1594, %v530
  %v1596 = vadd.f32 %v1595, %v531
  %v1597 = vmul.f32 %v1596, %v1469
  %1599 = vrot.lane.b32.xlu0 %v1596, 64
  %v1600 = vpop.permute.xlu0 %1599
  %v1602 = vmul.f32 %v1596, %v1600
  %1604 = vrot.lane.b32.xlu0 %v1602, 32
  %v1605 = vpop.permute.xlu0 %1604
  %v1607 = vadd.f32 %v1597, %v1605
  %v1608 = vtanh.pop %v1607
  %1610 = vrot.lane.b32.xlu0 %v1608, 64
  %v1611 = vpop.permute.xlu0 %1610
  %v1613 = vmul.f32 %v1596, %v1611
  %v1614 = vpack.c.bf16 %v1543, %v1543
  %1616 = vrot.lane.b32.xlu0 %v1614, 32
  %v1617 = vpop.permute.xlu0 %1616
  %v1619 = vsel %vm560, %v1617, 0
  %1621 = vmatprep.subr.bf16.mxu0 0
  %1622 = vmatpush1.bf16.msra.mxu0 0
  %1623 = vmatprep.subr.bf16.mxu0 0
  %1624 = vmatpush1.bf16.msra.mxu0 0
  %1625 = vmatprep.subr.bf16.mxu0 0
  %1626 = vmatpush1.bf16.msra.mxu0 0
  %1627 = vmatprep.subr.bf16.mxu0 0
  %1628 = vmatpush1.bf16.msra.mxu0 0
  %1629 = vmatprep.subr.bf16.mxu0 0
  %1630 = vmatpush1.bf16.msra.mxu0 0
  %1631 = vmatprep.subr.bf16.mxu0 0
  %1632 = vmatpush1.bf16.msra.mxu0 0
  %1633 = vmatprep.subr.bf16.mxu0 0
  %1634 = vmatpush1.bf16.msra.mxu0 %v634
  %1635 = vmatprep.subr.bf16.mxu0 0
  %1636 = vmatpush1.bf16.msra.mxu0 %v633
  %1637 = vmatprep.subr.bf16.mxu0 0
  %1638 = vmatpush2.bf16.msra.mxu0 0
  %1639 = vmatprep.subr.bf16.mxu0 0
  %1640 = vmatpush2.bf16.msra.mxu0 0
  %1641 = vmatprep.subr.bf16.mxu0 0
  %1642 = vmatpush2.bf16.msra.mxu0 0
  %1643 = vmatprep.subr.bf16.mxu0 0
  %1644 = vmatpush2.bf16.msra.mxu0 0
  %1645 = vmatprep.subr.bf16.mxu0 0
  %1646 = vmatpush2.bf16.msra.mxu0 0
  %1647 = vmatprep.subr.bf16.mxu0 0
  %1648 = vmatpush2.bf16.msra.mxu0 0
  %1649 = vmatprep.subr.bf16.mxu0 0
  %1650 = vmatpush2.bf16.msra.mxu0 0
  %1651 = vmatprep.subr.bf16.mxu0 0
  %1652 = vmatpush2.bf16.msra.mxu0 0
  %1653 = vmatprep.mubr.bf16.mxu0 0
  %1654 = vmatmul.mubr.bf16.gmra.mxu0 %v1619
  %v1655 = vpop.f32.mrf.mxu0
  %v1656 = vadd.f32 0.0, %v1655
  %v1657 = vpop.f32.mrf.mxu0
  %v1658 = vpop.f32.mrf.mxu0
  %v1659 = vpop.f32.mrf.mxu0
  %1660 = vdwg.mxu0
  %v1661 = vadd.f32 %v1545, %v1656
  %v1662 = vtanh.pop %v1661
  %v1663 = vmul.f32 %v1662, %v530
  %v1664 = vadd.f32 %v1663, %v531
  %v1665 = vmul.f32 %v1664, %v1537
  %1667 = vrot.lane.b32.xlu0 %v1664, 64
  %v1668 = vpop.permute.xlu0 %1667
  %v1670 = vmul.f32 %v1664, %v1668
  %1672 = vrot.lane.b32.xlu0 %v1670, 32
  %v1673 = vpop.permute.xlu0 %1672
  %v1675 = vadd.f32 %v1665, %v1673
  %v1676 = vtanh.pop %v1675
  %1678 = vrot.lane.b32.xlu0 %v1676, 64
  %v1679 = vpop.permute.xlu0 %1678
  %v1681 = vmul.f32 %v1664, %v1679
  %v1682 = vld [vmem:[%s5] sm:$0xff]
  %v1683 = vld [vmem:[%s5 + $0x8] sm:$0xff]
  %v1684 = vld [vmem:[%s5 + $0x10] sm:$0xff]
  %v1685 = vld [vmem:[%s5 + $0x18] sm:$0xff]
  %v1686 = vld [vmem:[%s5 + $0x20] sm:$0xff]
  %v1687 = vld [vmem:[%s5 + $0x28] sm:$0xff]
  %v1688 = vld [vmem:[%s5 + $0x30] sm:$0xff]
  %v1689 = vld [vmem:[%s5 + $0x38] sm:$0xff]
  %1691 = vrot.lane.b32.xlu0 %v1681, 32
  %v1692 = vpop.permute.xlu0 %1691
  %v1693 = vsel %vm560, %v1692, 0
  %1695 = vmatprep.subr.mxu0 0.0
  %1696 = vmatpush1.msra.mxu0 0.0
  %1697 = vmatprep.subr.mxu0 0.0
  %1698 = vmatpush1.msra.mxu0 0.0
  %1699 = vmatprep.subr.mxu0 0.0
  %1700 = vmatpush1.msra.mxu0 0.0
  %1701 = vmatprep.subr.mxu0 0.0
  %1702 = vmatpush1.msra.mxu0 0.0
  %1703 = vmatprep.subr.mxu0 0.0
  %1704 = vmatpush1.msra.mxu0 0.0
  %1705 = vmatprep.subr.mxu0 0.0
  %1706 = vmatpush1.msra.mxu0 0.0
  %1707 = vmatprep.subr.mxu0 0.0
  %1708 = vmatpush1.msra.mxu0 0.0
  %1709 = vmatprep.subr.mxu0 0.0
  %1710 = vmatpush1.msra.mxu0 0.0
  %1711 = vmatprep.subr.mxu0 0.0
  %1712 = vmatpush1.msra.mxu0 0.0
  %1713 = vmatprep.subr.mxu0 0.0
  %1714 = vmatpush1.msra.mxu0 0.0
  %1715 = vmatprep.subr.mxu0 0.0
  %1716 = vmatpush1.msra.mxu0 0.0
  %1717 = vmatprep.subr.mxu0 0.0
  %1718 = vmatpush1.msra.mxu0 0.0
  %1719 = vmatprep.subr.mxu0 0.0
  %1720 = vmatpush1.msra.mxu0 %v1689
  %1721 = vmatprep.subr.mxu0 0.0
  %1722 = vmatpush1.msra.mxu0 %v1688
  %1723 = vmatprep.subr.mxu0 0.0
  %1724 = vmatpush1.msra.mxu0 %v1687
  %1725 = vmatprep.subr.mxu0 0.0
  %1726 = vmatpush1.msra.mxu0 %v1686
  %1727 = vmatprep.subr.mxu0 0.0
  %1728 = vmatpush2.msra.mxu0 0.0
  %1729 = vmatprep.subr.mxu0 0.0
  %1730 = vmatpush2.msra.mxu0 0.0
  %1731 = vmatprep.subr.mxu0 0.0
  %1732 = vmatpush2.msra.mxu0 0.0
  %1733 = vmatprep.subr.mxu0 0.0
  %1734 = vmatpush2.msra.mxu0 0.0
  %1735 = vmatprep.subr.mxu0 0.0
  %1736 = vmatpush2.msra.mxu0 0.0
  %1737 = vmatprep.subr.mxu0 0.0
  %1738 = vmatpush2.msra.mxu0 0.0
  %1739 = vmatprep.subr.mxu0 0.0
  %1740 = vmatpush2.msra.mxu0 0.0
  %1741 = vmatprep.subr.mxu0 0.0
  %1742 = vmatpush2.msra.mxu0 0.0
  %1743 = vmatprep.subr.mxu0 0.0
  %1744 = vmatpush2.msra.mxu0 0.0
  %1745 = vmatprep.subr.mxu0 0.0
  %1746 = vmatpush2.msra.mxu0 0.0
  %1747 = vmatprep.subr.mxu0 0.0
  %1748 = vmatpush2.msra.mxu0 0.0
  %1749 = vmatprep.subr.mxu0 0.0
  %1750 = vmatpush2.msra.mxu0 0.0
  %1751 = vmatprep.subr.mxu0 0.0
  %1752 = vmatpush2.msra.mxu0 0.0
  %1753 = vmatprep.subr.mxu0 0.0
  %1754 = vmatpush2.msra.mxu0 0.0
  %1755 = vmatprep.subr.mxu0 0.0
  %1756 = vmatpush2.msra.mxu0 0.0
  %1757 = vmatprep.subr.mxu0 0.0
  %1758 = vmatpush2.msra.mxu0 0.0
  %1759 = vmatprep.mubr.f32.mxu0 0.0
  %1760 = vmatmul.mubr.f32.gmra.mxu0 %v1693
  %v1761 = vpop.f32.mrf.mxu0
  %v1762 = vadd.f32 0.0, %v1761
  %v1763 = vpop.f32.mrf.mxu0
  %1764 = vdwg.mxu0
  %1766 = vrot.lane.b32.xlu0 %v1613, 32
  %v1767 = vpop.permute.xlu0 %1766
  %v1768 = vsel %vm560, %v1767, 0
  %1770 = vmatprep.subr.mxu0 0.0
  %1771 = vmatpush1.msra.mxu0 0.0
  %1772 = vmatprep.subr.mxu0 0.0
  %1773 = vmatpush1.msra.mxu0 0.0
  %1774 = vmatprep.subr.mxu0 0.0
  %1775 = vmatpush1.msra.mxu0 0.0
  %1776 = vmatprep.subr.mxu0 0.0
  %1777 = vmatpush1.msra.mxu0 0.0
  %1778 = vmatprep.subr.mxu0 0.0
  %1779 = vmatpush1.msra.mxu0 0.0
  %1780 = vmatprep.subr.mxu0 0.0
  %1781 = vmatpush1.msra.mxu0 0.0
  %1782 = vmatprep.subr.mxu0 0.0
  %1783 = vmatpush1.msra.mxu0 0.0
  %1784 = vmatprep.subr.mxu0 0.0
  %1785 = vmatpush1.msra.mxu0 0.0
  %1786 = vmatprep.subr.mxu0 0.0
  %1787 = vmatpush1.msra.mxu0 0.0
  %1788 = vmatprep.subr.mxu0 0.0
  %1789 = vmatpush1.msra.mxu0 0.0
  %1790 = vmatprep.subr.mxu0 0.0
  %1791 = vmatpush1.msra.mxu0 0.0
  %1792 = vmatprep.subr.mxu0 0.0
  %1793 = vmatpush1.msra.mxu0 0.0
  %1794 = vmatprep.subr.mxu0 0.0
  %1795 = vmatpush1.msra.mxu0 %v1685
  %1796 = vmatprep.subr.mxu0 0.0
  %1797 = vmatpush1.msra.mxu0 %v1684
  %1798 = vmatprep.subr.mxu0 0.0
  %1799 = vmatpush1.msra.mxu0 %v1683
  %1800 = vmatprep.subr.mxu0 0.0
  %1801 = vmatpush1.msra.mxu0 %v1682
  %1802 = vmatprep.subr.mxu0 0.0
  %1803 = vmatpush2.msra.mxu0 0.0
  %1804 = vmatprep.subr.mxu0 0.0
  %1805 = vmatpush2.msra.mxu0 0.0
  %1806 = vmatprep.subr.mxu0 0.0
  %1807 = vmatpush2.msra.mxu0 0.0
  %1808 = vmatprep.subr.mxu0 0.0
  %1809 = vmatpush2.msra.mxu0 0.0
  %1810 = vmatprep.subr.mxu0 0.0
  %1811 = vmatpush2.msra.mxu0 0.0
  %1812 = vmatprep.subr.mxu0 0.0
  %1813 = vmatpush2.msra.mxu0 0.0
  %1814 = vmatprep.subr.mxu0 0.0
  %1815 = vmatpush2.msra.mxu0 0.0
  %1816 = vmatprep.subr.mxu0 0.0
  %1817 = vmatpush2.msra.mxu0 0.0
  %1818 = vmatprep.subr.mxu0 0.0
  %1819 = vmatpush2.msra.mxu0 0.0
  %1820 = vmatprep.subr.mxu0 0.0
  %1821 = vmatpush2.msra.mxu0 0.0
  %1822 = vmatprep.subr.mxu0 0.0
  %1823 = vmatpush2.msra.mxu0 0.0
  %1824 = vmatprep.subr.mxu0 0.0
  %1825 = vmatpush2.msra.mxu0 0.0
  %1826 = vmatprep.subr.mxu0 0.0
  %1827 = vmatpush2.msra.mxu0 0.0
  %1828 = vmatprep.subr.mxu0 0.0
  %1829 = vmatpush2.msra.mxu0 0.0
  %1830 = vmatprep.subr.mxu0 0.0
  %1831 = vmatpush2.msra.mxu0 0.0
  %1832 = vmatprep.subr.mxu0 0.0
  %1833 = vmatpush2.msra.mxu0 0.0
  %1834 = vmatprep.mubr.f32.mxu0 0.0
  %1835 = vmatmul.mubr.f32.gmra.mxu0 %v1768
  %v1836 = vpop.f32.mrf.mxu0
  %v1837 = vadd.f32 %v1762, %v1836
  %v1838 = vpop.f32.mrf.mxu0
  %1839 = vdwg.mxu0
  %v1840 = vld [vmem:[%s5 + $0x40] sm:$0xff]
  %v1841 = vld [vmem:[%s5 + $0x48] sm:$0xff]
  %v1842 = vld [vmem:[%s5 + $0x50] sm:$0xff]
  %v1843 = vld [vmem:[%s5 + $0x58] sm:$0xff]
  %v1844 = vrot.slane %v1613, 2
  %1845 = vrot.lane.b32.xlu0 %v1844, 32
  %v1846 = vpop.permute.xlu0 %1845
  %v1847 = vsel %vm560, %v1846, 0
  %1849 = vmatprep.subr.mxu0 0.0
  %1850 = vmatpush1.msra.mxu0 0.0
  %1851 = vmatprep.subr.mxu0 0.0
  %1852 = vmatpush1.msra.mxu0 0.0
  %1853 = vmatprep.subr.mxu0 0.0
  %1854 = vmatpush1.msra.mxu0 0.0
  %1855 = vmatprep.subr.mxu0 0.0
  %1856 = vmatpush1.msra.mxu0 0.0
  %1857 = vmatprep.subr.mxu0 0.0
  %1858 = vmatpush1.msra.mxu0 0.0
  %1859 = vmatprep.subr.mxu0 0.0
  %1860 = vmatpush1.msra.mxu0 0.0
  %1861 = vmatprep.subr.mxu0 0.0
  %1862 = vmatpush1.msra.mxu0 0.0
  %1863 = vmatprep.subr.mxu0 0.0
  %1864 = vmatpush1.msra.mxu0 0.0
  %1865 = vmatprep.subr.mxu0 0.0
  %1866 = vmatpush1.msra.mxu0 0.0
  %1867 = vmatprep.subr.mxu0 0.0
  %1868 = vmatpush1.msra.mxu0 0.0
  %1869 = vmatprep.subr.mxu0 0.0
  %1870 = vmatpush1.msra.mxu0 0.0
  %1871 = vmatprep.subr.mxu0 0.0
  %1872 = vmatpush1.msra.mxu0 0.0
  %1873 = vmatprep.subr.mxu0 0.0
  %1874 = vmatpush1.msra.mxu0 %v1843
  %1875 = vmatprep.subr.mxu0 0.0
  %1876 = vmatpush1.msra.mxu0 %v1842
  %1877 = vmatprep.subr.mxu0 0.0
  %1878 = vmatpush1.msra.mxu0 %v1841
  %1879 = vmatprep.subr.mxu0 0.0
  %1880 = vmatpush1.msra.mxu0 %v1840
  %1881 = vmatprep.subr.mxu0 0.0
  %1882 = vmatpush2.msra.mxu0 0.0
  %1883 = vmatprep.subr.mxu0 0.0
  %1884 = vmatpush2.msra.mxu0 0.0
  %1885 = vmatprep.subr.mxu0 0.0
  %1886 = vmatpush2.msra.mxu0 0.0
  %1887 = vmatprep.subr.mxu0 0.0
  %1888 = vmatpush2.msra.mxu0 0.0
  %1889 = vmatprep.subr.mxu0 0.0
  %1890 = vmatpush2.msra.mxu0 0.0
  %1891 = vmatprep.subr.mxu0 0.0
  %1892 = vmatpush2.msra.mxu0 0.0
  %1893 = vmatprep.subr.mxu0 0.0
  %1894 = vmatpush2.msra.mxu0 0.0
  %1895 = vmatprep.subr.mxu0 0.0
  %1896 = vmatpush2.msra.mxu0 0.0
  %1897 = vmatprep.subr.mxu0 0.0
  %1898 = vmatpush2.msra.mxu0 0.0
  %1899 = vmatprep.subr.mxu0 0.0
  %1900 = vmatpush2.msra.mxu0 0.0
  %1901 = vmatprep.subr.mxu0 0.0
  %1902 = vmatpush2.msra.mxu0 0.0
  %1903 = vmatprep.subr.mxu0 0.0
  %1904 = vmatpush2.msra.mxu0 0.0
  %1905 = vmatprep.subr.mxu0 0.0
  %1906 = vmatpush2.msra.mxu0 0.0
  %1907 = vmatprep.subr.mxu0 0.0
  %1908 = vmatpush2.msra.mxu0 0.0
  %1909 = vmatprep.subr.mxu0 0.0
  %1910 = vmatpush2.msra.mxu0 0.0
  %1911 = vmatprep.subr.mxu0 0.0
  %1912 = vmatpush2.msra.mxu0 0.0
  %1913 = vmatprep.mubr.f32.mxu0 0.0
  %1914 = vmatmul.mubr.f32.gmra.mxu0 %v1847
  %v1915 = vpop.f32.mrf.mxu0
  %v1916 = vadd.f32 0.0, %v1915
  %v1917 = vpop.f32.mrf.mxu0
  %1918 = vdwg.mxu0
  %v1919 = vadd.f32 %v1837, %v1916
  %v1920 = vld [vmem:[%s5 + $0x60] sm:$0xff]
  %v1921 = vld [vmem:[%s5 + $0x68] sm:$0xff]
  %v1922 = vld [vmem:[%s5 + $0x70] sm:$0xff]
  %v1923 = vld [vmem:[%s5 + $0x78] sm:$0xff]
  %v1924 = vrot.slane %v1681, 2
  %1925 = vrot.lane.b32.xlu0 %v1924, 32
  %v1926 = vpop.permute.xlu0 %1925
  %v1927 = vsel %vm560, %v1926, 0
  %1929 = vmatprep.subr.mxu0 0.0
  %1930 = vmatpush1.msra.mxu0 0.0
  %1931 = vmatprep.subr.mxu0 0.0
  %1932 = vmatpush1.msra.mxu0 0.0
  %1933 = vmatprep.subr.mxu0 0.0
  %1934 = vmatpush1.msra.mxu0 0.0
  %1935 = vmatprep.subr.mxu0 0.0
  %1936 = vmatpush1.msra.mxu0 0.0
  %1937 = vmatprep.subr.mxu0 0.0
  %1938 = vmatpush1.msra.mxu0 0.0
  %1939 = vmatprep.subr.mxu0 0.0
  %1940 = vmatpush1.msra.mxu0 0.0
  %1941 = vmatprep.subr.mxu0 0.0
  %1942 = vmatpush1.msra.mxu0 0.0
  %1943 = vmatprep.subr.mxu0 0.0
  %1944 = vmatpush1.msra.mxu0 0.0
  %1945 = vmatprep.subr.mxu0 0.0
  %1946 = vmatpush1.msra.mxu0 0.0
  %1947 = vmatprep.subr.mxu0 0.0
  %1948 = vmatpush1.msra.mxu0 0.0
  %1949 = vmatprep.subr.mxu0 0.0
  %1950 = vmatpush1.msra.mxu0 0.0
  %1951 = vmatprep.subr.mxu0 0.0
  %1952 = vmatpush1.msra.mxu0 0.0
  %1953 = vmatprep.subr.mxu0 0.0
  %1954 = vmatpush1.msra.mxu0 %v1923
  %1955 = vmatprep.subr.mxu0 0.0
  %1956 = vmatpush1.msra.mxu0 %v1922
  %1957 = vmatprep.subr.mxu0 0.0
  %1958 = vmatpush1.msra.mxu0 %v1921
  %1959 = vmatprep.subr.mxu0 0.0
  %1960 = vmatpush1.msra.mxu0 %v1920
  %1961 = vmatprep.subr.mxu0 0.0
  %1962 = vmatpush2.msra.mxu0 0.0
  %1963 = vmatprep.subr.mxu0 0.0
  %1964 = vmatpush2.msra.mxu0 0.0
  %1965 = vmatprep.subr.mxu0 0.0
  %1966 = vmatpush2.msra.mxu0 0.0
  %1967 = vmatprep.subr.mxu0 0.0
  %1968 = vmatpush2.msra.mxu0 0.0
  %1969 = vmatprep.subr.mxu0 0.0
  %1970 = vmatpush2.msra.mxu0 0.0
  %1971 = vmatprep.subr.mxu0 0.0
  %1972 = vmatpush2.msra.mxu0 0.0
  %1973 = vmatprep.subr.mxu0 0.0
  %1974 = vmatpush2.msra.mxu0 0.0
  %1975 = vmatprep.subr.mxu0 0.0
  %1976 = vmatpush2.msra.mxu0 0.0
  %1977 = vmatprep.subr.mxu0 0.0
  %1978 = vmatpush2.msra.mxu0 0.0
  %1979 = vmatprep.subr.mxu0 0.0
  %1980 = vmatpush2.msra.mxu0 0.0
  %1981 = vmatprep.subr.mxu0 0.0
  %1982 = vmatpush2.msra.mxu0 0.0
  %1983 = vmatprep.subr.mxu0 0.0
  %1984 = vmatpush2.msra.mxu0 0.0
  %1985 = vmatprep.subr.mxu0 0.0
  %1986 = vmatpush2.msra.mxu0 0.0
  %1987 = vmatprep.subr.mxu0 0.0
  %1988 = vmatpush2.msra.mxu0 0.0
  %1989 = vmatprep.subr.mxu0 0.0
  %1990 = vmatpush2.msra.mxu0 0.0
  %1991 = vmatprep.subr.mxu0 0.0
  %1992 = vmatpush2.msra.mxu0 0.0
  %1993 = vmatprep.mubr.f32.mxu0 0.0
  %1994 = vmatmul.mubr.f32.gmra.mxu0 %v1927
  %v1995 = vpop.f32.mrf.mxu0
  %v1996 = vadd.f32 0.0, %v1995
  %v1997 = vpop.f32.mrf.mxu0
  %1998 = vdwg.mxu0
  %v1999 = vadd.f32 %v1919, %v1996
  %v2000 = vld [vmem:[%s5 + $0x80] sm:$0xff]
  %v2001 = vld [vmem:[%s5 + $0x88] sm:$0xff]
  %v2002 = vld [vmem:[%s5 + $0x90] sm:$0xff]
  %v2003 = vld [vmem:[%s5 + $0x98] sm:$0xff]
  %v2004 = vrot.slane %v1613, 4
  %2005 = vrot.lane.b32.xlu0 %v2004, 32
  %v2006 = vpop.permute.xlu0 %2005
  %v2007 = vsel %vm560, %v2006, 0
  %2009 = vmatprep.subr.mxu0 0.0
  %2010 = vmatpush1.msra.mxu0 0.0
  %2011 = vmatprep.subr.mxu0 0.0
  %2012 = vmatpush1.msra.mxu0 0.0
  %2013 = vmatprep.subr.mxu0 0.0
  %2014 = vmatpush1.msra.mxu0 0.0
  %2015 = vmatprep.subr.mxu0 0.0
  %2016 = vmatpush1.msra.mxu0 0.0
  %2017 = vmatprep.subr.mxu0 0.0
  %2018 = vmatpush1.msra.mxu0 0.0
  %2019 = vmatprep.subr.mxu0 0.0
  %2020 = vmatpush1.msra.mxu0 0.0
  %2021 = vmatprep.subr.mxu0 0.0
  %2022 = vmatpush1.msra.mxu0 0.0
  %2023 = vmatprep.subr.mxu0 0.0
  %2024 = vmatpush1.msra.mxu0 0.0
  %2025 = vmatprep.subr.mxu0 0.0
  %2026 = vmatpush1.msra.mxu0 0.0
  %2027 = vmatprep.subr.mxu0 0.0
  %2028 = vmatpush1.msra.mxu0 0.0
  %2029 = vmatprep.subr.mxu0 0.0
  %2030 = vmatpush1.msra.mxu0 0.0
  %2031 = vmatprep.subr.mxu0 0.0
  %2032 = vmatpush1.msra.mxu0 0.0
  %2033 = vmatprep.subr.mxu0 0.0
  %2034 = vmatpush1.msra.mxu0 %v2003
  %2035 = vmatprep.subr.mxu0 0.0
  %2036 = vmatpush1.msra.mxu0 %v2002
  %2037 = vmatprep.subr.mxu0 0.0
  %2038 = vmatpush1.msra.mxu0 %v2001
  %2039 = vmatprep.subr.mxu0 0.0
  %2040 = vmatpush1.msra.mxu0 %v2000
  %2041 = vmatprep.subr.mxu0 0.0
  %2042 = vmatpush2.msra.mxu0 0.0
  %2043 = vmatprep.subr.mxu0 0.0
  %2044 = vmatpush2.msra.mxu0 0.0
  %2045 = vmatprep.subr.mxu0 0.0
  %2046 = vmatpush2.msra.mxu0 0.0
  %2047 = vmatprep.subr.mxu0 0.0
  %2048 = vmatpush2.msra.mxu0 0.0
  %2049 = vmatprep.subr.mxu0 0.0
  %2050 = vmatpush2.msra.mxu0 0.0
  %2051 = vmatprep.subr.mxu0 0.0
  %2052 = vmatpush2.msra.mxu0 0.0
  %2053 = vmatprep.subr.mxu0 0.0
  %2054 = vmatpush2.msra.mxu0 0.0
  %2055 = vmatprep.subr.mxu0 0.0
  %2056 = vmatpush2.msra.mxu0 0.0
  %2057 = vmatprep.subr.mxu0 0.0
  %2058 = vmatpush2.msra.mxu0 0.0
  %2059 = vmatprep.subr.mxu0 0.0
  %2060 = vmatpush2.msra.mxu0 0.0
  %2061 = vmatprep.subr.mxu0 0.0
  %2062 = vmatpush2.msra.mxu0 0.0
  %2063 = vmatprep.subr.mxu0 0.0
  %2064 = vmatpush2.msra.mxu0 0.0
  %2065 = vmatprep.subr.mxu0 0.0
  %2066 = vmatpush2.msra.mxu0 0.0
  %2067 = vmatprep.subr.mxu0 0.0
  %2068 = vmatpush2.msra.mxu0 0.0
  %2069 = vmatprep.subr.mxu0 0.0
  %2070 = vmatpush2.msra.mxu0 0.0
  %2071 = vmatprep.subr.mxu0 0.0
  %2072 = vmatpush2.msra.mxu0 0.0
  %2073 = vmatprep.mubr.f32.mxu0 0.0
  %2074 = vmatmul.mubr.f32.gmra.mxu0 %v2007
  %v2075 = vpop.f32.mrf.mxu0
  %v2076 = vadd.f32 0.0, %v2075
  %v2077 = vpop.f32.mrf.mxu0
  %2078 = vdwg.mxu0
  %v2079 = vadd.f32 %v1999, %v2076
  %v2080 = vld [vmem:[%s5 + $0xa0] sm:$0xff]
  %v2081 = vld [vmem:[%s5 + $0xa8] sm:$0xff]
  %v2082 = vld [vmem:[%s5 + $0xb0] sm:$0xff]
  %v2083 = vld [vmem:[%s5 + $0xb8] sm:$0xff]
  %v2084 = vrot.slane %v1681, 4
  %2085 = vrot.lane.b32.xlu0 %v2084, 32
  %v2086 = vpop.permute.xlu0 %2085
  %v2087 = vsel %vm560, %v2086, 0
  %2089 = vmatprep.subr.mxu0 0.0
  %2090 = vmatpush1.msra.mxu0 0.0
  %2091 = vmatprep.subr.mxu0 0.0
  %2092 = vmatpush1.msra.mxu0 0.0
  %2093 = vmatprep.subr.mxu0 0.0
  %2094 = vmatpush1.msra.mxu0 0.0
  %2095 = vmatprep.subr.mxu0 0.0
  %2096 = vmatpush1.msra.mxu0 0.0
  %2097 = vmatprep.subr.mxu0 0.0
  %2098 = vmatpush1.msra.mxu0 0.0
  %2099 = vmatprep.subr.mxu0 0.0
  %2100 = vmatpush1.msra.mxu0 0.0
  %2101 = vmatprep.subr.mxu0 0.0
  %2102 = vmatpush1.msra.mxu0 0.0
  %2103 = vmatprep.subr.mxu0 0.0
  %2104 = vmatpush1.msra.mxu0 0.0
  %2105 = vmatprep.subr.mxu0 0.0
  %2106 = vmatpush1.msra.mxu0 0.0
  %2107 = vmatprep.subr.mxu0 0.0
  %2108 = vmatpush1.msra.mxu0 0.0
  %2109 = vmatprep.subr.mxu0 0.0
  %2110 = vmatpush1.msra.mxu0 0.0
  %2111 = vmatprep.subr.mxu0 0.0
  %2112 = vmatpush1.msra.mxu0 0.0
  %2113 = vmatprep.subr.mxu0 0.0
  %2114 = vmatpush1.msra.mxu0 %v2083
  %2115 = vmatprep.subr.mxu0 0.0
  %2116 = vmatpush1.msra.mxu0 %v2082
  %2117 = vmatprep.subr.mxu0 0.0
  %2118 = vmatpush1.msra.mxu0 %v2081
  %2119 = vmatprep.subr.mxu0 0.0
  %2120 = vmatpush1.msra.mxu0 %v2080
  %2121 = vmatprep.subr.mxu0 0.0
  %2122 = vmatpush2.msra.mxu0 0.0
  %2123 = vmatprep.subr.mxu0 0.0
  %2124 = vmatpush2.msra.mxu0 0.0
  %2125 = vmatprep.subr.mxu0 0.0
  %2126 = vmatpush2.msra.mxu0 0.0
  %2127 = vmatprep.subr.mxu0 0.0
  %2128 = vmatpush2.msra.mxu0 0.0
  %2129 = vmatprep.subr.mxu0 0.0
  %2130 = vmatpush2.msra.mxu0 0.0
  %2131 = vmatprep.subr.mxu0 0.0
  %2132 = vmatpush2.msra.mxu0 0.0
  %2133 = vmatprep.subr.mxu0 0.0
  %2134 = vmatpush2.msra.mxu0 0.0
  %2135 = vmatprep.subr.mxu0 0.0
  %2136 = vmatpush2.msra.mxu0 0.0
  %2137 = vmatprep.subr.mxu0 0.0
  %2138 = vmatpush2.msra.mxu0 0.0
  %2139 = vmatprep.subr.mxu0 0.0
  %2140 = vmatpush2.msra.mxu0 0.0
  %2141 = vmatprep.subr.mxu0 0.0
  %2142 = vmatpush2.msra.mxu0 0.0
  %2143 = vmatprep.subr.mxu0 0.0
  %2144 = vmatpush2.msra.mxu0 0.0
  %2145 = vmatprep.subr.mxu0 0.0
  %2146 = vmatpush2.msra.mxu0 0.0
  %2147 = vmatprep.subr.mxu0 0.0
  %2148 = vmatpush2.msra.mxu0 0.0
  %2149 = vmatprep.subr.mxu0 0.0
  %2150 = vmatpush2.msra.mxu0 0.0
  %2151 = vmatprep.subr.mxu0 0.0
  %2152 = vmatpush2.msra.mxu0 0.0
  %2153 = vmatprep.mubr.f32.mxu0 0.0
  %2154 = vmatmul.mubr.f32.gmra.mxu0 %v2087
  %v2155 = vpop.f32.mrf.mxu0
  %v2156 = vadd.f32 0.0, %v2155
  %v2157 = vpop.f32.mrf.mxu0
  %2158 = vdwg.mxu0
  %v2159 = vadd.f32 %v2079, %v2156
  %v2160 = vld [vmem:[%s5 + $0xc0] sm:$0xff]
  %v2161 = vld [vmem:[%s5 + $0xc8] sm:$0xff]
  %v2162 = vld [vmem:[%s5 + $0xd0] sm:$0xff]
  %v2163 = vld [vmem:[%s5 + $0xd8] sm:$0xff]
  %v2164 = vrot.slane %v1613, 6
  %2165 = vrot.lane.b32.xlu0 %v2164, 32
  %v2166 = vpop.permute.xlu0 %2165
  %v2167 = vsel %vm560, %v2166, 0
  %2169 = vmatprep.subr.mxu0 0.0
  %2170 = vmatpush1.msra.mxu0 0.0
  %2171 = vmatprep.subr.mxu0 0.0
  %2172 = vmatpush1.msra.mxu0 0.0
  %2173 = vmatprep.subr.mxu0 0.0
  %2174 = vmatpush1.msra.mxu0 0.0
  %2175 = vmatprep.subr.mxu0 0.0
  %2176 = vmatpush1.msra.mxu0 0.0
  %2177 = vmatprep.subr.mxu0 0.0
  %2178 = vmatpush1.msra.mxu0 0.0
  %2179 = vmatprep.subr.mxu0 0.0
  %2180 = vmatpush1.msra.mxu0 0.0
  %2181 = vmatprep.subr.mxu0 0.0
  %2182 = vmatpush1.msra.mxu0 0.0
  %2183 = vmatprep.subr.mxu0 0.0
  %2184 = vmatpush1.msra.mxu0 0.0
  %2185 = vmatprep.subr.mxu0 0.0
  %2186 = vmatpush1.msra.mxu0 0.0
  %2187 = vmatprep.subr.mxu0 0.0
  %2188 = vmatpush1.msra.mxu0 0.0
  %2189 = vmatprep.subr.mxu0 0.0
  %2190 = vmatpush1.msra.mxu0 0.0
  %2191 = vmatprep.subr.mxu0 0.0
  %2192 = vmatpush1.msra.mxu0 0.0
  %2193 = vmatprep.subr.mxu0 0.0
  %2194 = vmatpush1.msra.mxu0 %v2163
  %2195 = vmatprep.subr.mxu0 0.0
  %2196 = vmatpush1.msra.mxu0 %v2162
  %2197 = vmatprep.subr.mxu0 0.0
  %2198 = vmatpush1.msra.mxu0 %v2161
  %2199 = vmatprep.subr.mxu0 0.0
  %2200 = vmatpush1.msra.mxu0 %v2160
  %2201 = vmatprep.subr.mxu0 0.0
  %2202 = vmatpush2.msra.mxu0 0.0
  %2203 = vmatprep.subr.mxu0 0.0
  %2204 = vmatpush2.msra.mxu0 0.0
  %2205 = vmatprep.subr.mxu0 0.0
  %2206 = vmatpush2.msra.mxu0 0.0
  %2207 = vmatprep.subr.mxu0 0.0
  %2208 = vmatpush2.msra.mxu0 0.0
  %2209 = vmatprep.subr.mxu0 0.0
  %2210 = vmatpush2.msra.mxu0 0.0
  %2211 = vmatprep.subr.mxu0 0.0
  %2212 = vmatpush2.msra.mxu0 0.0
  %2213 = vmatprep.subr.mxu0 0.0
  %2214 = vmatpush2.msra.mxu0 0.0
  %2215 = vmatprep.subr.mxu0 0.0
  %2216 = vmatpush2.msra.mxu0 0.0
  %2217 = vmatprep.subr.mxu0 0.0
  %2218 = vmatpush2.msra.mxu0 0.0
  %2219 = vmatprep.subr.mxu0 0.0
  %2220 = vmatpush2.msra.mxu0 0.0
  %2221 = vmatprep.subr.mxu0 0.0
  %2222 = vmatpush2.msra.mxu0 0.0
  %2223 = vmatprep.subr.mxu0 0.0
  %2224 = vmatpush2.msra.mxu0 0.0
  %2225 = vmatprep.subr.mxu0 0.0
  %2226 = vmatpush2.msra.mxu0 0.0
  %2227 = vmatprep.subr.mxu0 0.0
  %2228 = vmatpush2.msra.mxu0 0.0
  %2229 = vmatprep.subr.mxu0 0.0
  %2230 = vmatpush2.msra.mxu0 0.0
  %2231 = vmatprep.subr.mxu0 0.0
  %2232 = vmatpush2.msra.mxu0 0.0
  %2233 = vmatprep.mubr.f32.mxu0 0.0
  %2234 = vmatmul.mubr.f32.gmra.mxu0 %v2167
  %v2235 = vpop.f32.mrf.mxu0
  %v2236 = vadd.f32 0.0, %v2235
  %v2237 = vpop.f32.mrf.mxu0
  %2238 = vdwg.mxu0
  %v2239 = vadd.f32 %v2159, %v2236
  %v2240 = vld [vmem:[%s5 + $0xe0] sm:$0xff]
  %v2241 = vld [vmem:[%s5 + $0xe8] sm:$0xff]
  %v2242 = vld [vmem:[%s5 + $0xf0] sm:$0xff]
  %v2243 = vld [vmem:[%s5 + $0xf8] sm:$0xff]
  %v2244 = vrot.slane %v1681, 6
  %2245 = vrot.lane.b32.xlu0 %v2244, 32
  %v2246 = vpop.permute.xlu0 %2245
  %v2247 = vsel %vm560, %v2246, 0
  %2249 = vmatprep.subr.mxu0 0.0
  %2250 = vmatpush1.msra.mxu0 0.0
  %2251 = vmatprep.subr.mxu0 0.0
  %2252 = vmatpush1.msra.mxu0 0.0
  %2253 = vmatprep.subr.mxu0 0.0
  %2254 = vmatpush1.msra.mxu0 0.0
  %2255 = vmatprep.subr.mxu0 0.0
  %2256 = vmatpush1.msra.mxu0 0.0
  %2257 = vmatprep.subr.mxu0 0.0
  %2258 = vmatpush1.msra.mxu0 0.0
  %2259 = vmatprep.subr.mxu0 0.0
  %2260 = vmatpush1.msra.mxu0 0.0
  %2261 = vmatprep.subr.mxu0 0.0
  %2262 = vmatpush1.msra.mxu0 0.0
  %2263 = vmatprep.subr.mxu0 0.0
  %2264 = vmatpush1.msra.mxu0 0.0
  %2265 = vmatprep.subr.mxu0 0.0
  %2266 = vmatpush1.msra.mxu0 0.0
  %2267 = vmatprep.subr.mxu0 0.0
  %2268 = vmatpush1.msra.mxu0 0.0
  %2269 = vmatprep.subr.mxu0 0.0
  %2270 = vmatpush1.msra.mxu0 0.0
  %2271 = vmatprep.subr.mxu0 0.0
  %2272 = vmatpush1.msra.mxu0 0.0
  %2273 = vmatprep.subr.mxu0 0.0
  %2274 = vmatpush1.msra.mxu0 %v2243
  %2275 = vmatprep.subr.mxu0 0.0
  %2276 = vmatpush1.msra.mxu0 %v2242
  %2277 = vmatprep.subr.mxu0 0.0
  %2278 = vmatpush1.msra.mxu0 %v2241
  %2279 = vmatprep.subr.mxu0 0.0
  %2280 = vmatpush1.msra.mxu0 %v2240
  %2281 = vmatprep.subr.mxu0 0.0
  %2282 = vmatpush2.msra.mxu0 0.0
  %2283 = vmatprep.subr.mxu0 0.0
  %2284 = vmatpush2.msra.mxu0 0.0
  %2285 = vmatprep.subr.mxu0 0.0
  %2286 = vmatpush2.msra.mxu0 0.0
  %2287 = vmatprep.subr.mxu0 0.0
  %2288 = vmatpush2.msra.mxu0 0.0
  %2289 = vmatprep.subr.mxu0 0.0
  %2290 = vmatpush2.msra.mxu0 0.0
  %2291 = vmatprep.subr.mxu0 0.0
  %2292 = vmatpush2.msra.mxu0 0.0
  %2293 = vmatprep.subr.mxu0 0.0
  %2294 = vmatpush2.msra.mxu0 0.0
  %2295 = vmatprep.subr.mxu0 0.0
  %2296 = vmatpush2.msra.mxu0 0.0
  %2297 = vmatprep.subr.mxu0 0.0
  %2298 = vmatpush2.msra.mxu0 0.0
  %2299 = vmatprep.subr.mxu0 0.0
  %2300 = vmatpush2.msra.mxu0 0.0
  %2301 = vmatprep.subr.mxu0 0.0
  %2302 = vmatpush2.msra.mxu0 0.0
  %2303 = vmatprep.subr.mxu0 0.0
  %2304 = vmatpush2.msra.mxu0 0.0
  %2305 = vmatprep.subr.mxu0 0.0
  %2306 = vmatpush2.msra.mxu0 0.0
  %2307 = vmatprep.subr.mxu0 0.0
  %2308 = vmatpush2.msra.mxu0 0.0
  %2309 = vmatprep.subr.mxu0 0.0
  %2310 = vmatpush2.msra.mxu0 0.0
  %2311 = vmatprep.subr.mxu0 0.0
  %2312 = vmatpush2.msra.mxu0 0.0
  %2313 = vmatprep.mubr.f32.mxu0 0.0
  %2314 = vmatmul.mubr.f32.gmra.mxu0 %v2247
  %v2315 = vpop.f32.mrf.mxu0
  %v2316 = vadd.f32 0.0, %v2315
  %v2317 = vpop.f32.mrf.mxu0
  %2318 = vdwg.mxu0
  %v2319 = vadd.f32 %v2239, %v2316
  %v2320 = vld [vmem:[#allocation3] sm:$0x1]
  %v2322 = vlaneseq
  %v2323 = vshrl.u32 %v2322, 7
  %v2324 = vsub.s32 0, %v2323
  %v2325 = vrot.slane %v2320, %v2324
  %v2327 = vadd.f32 %v2319, %v2325
  %v2328 = vxor.u32 %v2327, 2147483648
  %v2329 = vmul.f32 %v2328, 1.442695
  %v2330 = vpow.pop %v2329
  %v2331 = vadd.f32 %v2330, 1.0
  %v2332 = vrcp.pop %v2331
  %v2333 = vmul.f32 1.0, %v2332
  %vm2334 = vcmask 1024
  %2335 = vst.msk [vmem:[%s7] sm:$0x3] %vm2334, %v2333
  // Predicated region
  $region30: #{news_model_forward.1} parent=0 // pred_check
    _
  $region31: #{news_model_forward.1} parent=0 // pred_check_branch
    %2337 = sbr.rel (0) target = $region33
  $region32: #{news_model_forward.1} parent=0 // pred_region
    _
  $region33: #{news_model_forward.1} parent=0 // pred_fallthru
    _
  // Predicated region
  $region34: #{news_model_forward.1} parent=0 // pred_check
    _
  $region35: #{news_model_forward.1} parent=0 // pred_check_branch
    %2339 = sbr.rel (0) target = $region37
  $region36: #{news_model_forward.1} parent=0 // pred_region
    _
  $region37: #{news_model_forward.1} parent=0 // pred_fallthru
    _

</llo_original>
